<compile_context>
chip_gen: v7x
topology: tpu7x:2x2x1
jax: 0.10.0
libtpu: 0.0.40
codegen_flags: <defaults>
</compile_context>

<pallas_src>
import functools
import math

import jax
import jax.numpy as jnp
from jax import lax
from jax.experimental import pallas as pl
from jax.experimental.pallas import tpu as pltpu


# ---------------------------------------------------------------------------
# Fused kernel (one grid step == one graph)
# ---------------------------------------------------------------------------
def _fused_middle_layer_kernel(
    x_ref,       # [num_nodes, feat]            bf16
    wqkv_ref,    # [3*2*H, feat, feat]          bf16  (q pre-scaled by 1/sqrt(feat))
    bqkv_ref,    # [3*2*H, 1, feat]             f32   (q bias pre-scaled)
    wp_ref,      # [2*H, feat, feat]            bf16  (proj weight per (group, head))
    bp_ref,      # [1, feat]                    f32
    o_ref,       # [num_nodes, feat]            f32
    *,
    num_wkr, num_tsk, feat_dim, num_heads,
):
    n = num_wkr + num_tsk
    H = num_heads
    GH = 2 * H                       # "virtual heads": (group, head) pairs

    x = x_ref[...]                                           # [n, F] bf16
    xb = jnp.broadcast_to(x, (3 * GH, n, feat_dim))          # [3*GH, n, F]

    # Single batched QKV projection covering both node groups and all heads.
    qkv = lax.dot_general(
        xb, wqkv_ref[...],
        dimension_numbers=(((2,), (1,)), ((0,), (0,))),
        preferred_element_type=jnp.float32)                  # [3*GH, n, F] f32
    qkv = (qkv + bqkv_ref[...]).astype(jnp.bfloat16)

    q = qkv[0:GH]                                            # [GH, n, F]
    k = qkv[GH:2 * GH]
    v = qkv[2 * GH:3 * GH]

    # Head-batched Q.K^T (scale already folded into Q).
    s = lax.dot_general(
        q, k,
        dimension_numbers=(((2,), (2,)), ((0,), (0,))),
        preferred_element_type=jnp.float32)                  # [GH, n, n] f32

    # Block-diagonal group mask: wkr rows attend only to wkr cols, tsk to tsk.
    row = lax.broadcasted_iota(jnp.int32, (n, n), 0)
    col = lax.broadcasted_iota(jnp.int32, (n, n), 1)
    same_group = (row < num_wkr) == (col < num_wkr)
    mask_add = jnp.where(same_group, 0.0, -1e30).astype(jnp.float32)
    s = s + mask_add[None, :, :]

    # Numerically stable softmax, all in f32 (v5e has no bf16 VPU/EUP);
    # the reciprocal goes to the EUP slot (approx -> ~bf16-level row-sum error).
    m = jnp.max(s, axis=-1, keepdims=True)
    p = jnp.exp(s - m)
    denom = jnp.sum(p, axis=-1, keepdims=True)
    w = p * pl.reciprocal(denom, approx=True)

    # Head-batched P.V with bf16 probabilities (f32 accumulation).
    attn = lax.dot_general(
        w.astype(jnp.bfloat16), v,
        dimension_numbers=(((2,), (1,)), ((0,), (0,))),
        preferred_element_type=jnp.float32)                  # [GH, n, F] f32

    # Output projection, batched per (group, head); the per-head lane concat of
    # the reference is folded into a sum over per-head projections.
    part = lax.dot_general(
        attn.astype(jnp.bfloat16), wp_ref[...],
        dimension_numbers=(((2,), (1,)), ((0,), (0,))),
        preferred_element_type=jnp.float32)                  # [GH, n, F] f32
    out_wkr = jnp.sum(part[0:H], axis=0)                     # wkr-weight heads
    out_tsk = jnp.sum(part[H:GH], axis=0)                    # tsk-weight heads

    rows = lax.broadcasted_iota(jnp.int32, (n, 1), 0)
    out2d = jnp.where(rows < num_wkr, out_wkr, out_tsk) + bp_ref[...]
    o_ref[...] = out2d.astype(o_ref.dtype)


# ---------------------------------------------------------------------------
# Wrappers
# ---------------------------------------------------------------------------
def middle_layer_forward_batched(features_b, packed, num_wkr, num_tsk,
                                 feat_dim, num_heads):
    """features_b: [B, num_nodes, 1, feat] -> [B, num_nodes, 1, feat] (f32)."""
    B = features_b.shape[0]
    num_nodes = num_wkr + num_tsk
    x_b = features_b[:, :, 0, :].astype(jnp.bfloat16)        # [B, n, F] bf16

    kernel = functools.partial(
        _fused_middle_layer_kernel,
        num_wkr=num_wkr, num_tsk=num_tsk,
        feat_dim=feat_dim, num_heads=num_heads)

    w_qkv, b_qkv = packed["w_qkv"], packed["b_qkv"]
    w_proj, b_proj = packed["w_proj"], packed["b_proj"]

    def const_spec(a):
        # Full-array block, constant block index -> stays VMEM-resident across
        # the whole batch grid (no per-step weight DMA).
        return pl.BlockSpec(a.shape, lambda b, nd=a.ndim: (0,) * nd)

    out = pl.pallas_call(
        kernel,
        grid=(B,),
        out_shape=jax.ShapeDtypeStruct((B, num_nodes, feat_dim), jnp.float32),
        in_specs=[
            pl.BlockSpec((None, num_nodes, feat_dim), lambda b: (b, 0, 0)),
            const_spec(w_qkv), const_spec(b_qkv),
            const_spec(w_proj), const_spec(b_proj),
        ],
        out_specs=pl.BlockSpec((None, num_nodes, feat_dim), lambda b: (b, 0, 0)),
        compiler_params=pltpu.CompilerParams(
            dimension_semantics=("parallel",)),
    )(x_b, w_qkv, b_qkv, w_proj, b_proj)

    return out[:, :, None, :]                                # re-insert the 1 dim


def middle_layer_forward(features, packed, num_wkr, num_tsk, feat_dim, num_heads):
    """Original module signature: [num_nodes, 1, feat] -> [num_nodes, 1, feat]."""
    out = middle_layer_forward_batched(features[None], packed, num_wkr, num_tsk,
                                       feat_dim, num_heads)
    return out[0]


# ---------------------------------------------------------------------------
# Parameter init (mimics nn.Linear U(-1/sqrt(fan_in), 1/sqrt(fan_in))) + packing
# ---------------------------------------------------------------------------
def _init_linear(key, in_dim, out_dim, dtype=jnp.float32):
    kw, kb = jax.random.split(key)
    bound = 1.0 / math.sqrt(in_dim)
    w = jax.random.uniform(kw, (in_dim, out_dim), dtype, minval=-bound, maxval=bound)
    b = jax.random.uniform(kb, (1, out_dim), dtype, minval=-bound, maxval=bound)
    return w, b


def init_middle_layer_params(key, feat_dim, num_heads):
    heads = []
    for h in range(num_heads):
        hkey = jax.random.fold_in(key, h)
        names = ["q_wkr", "k_wkr", "v_wkr", "q_tsk", "k_tsk", "v_tsk"]
        hp = {}
        for i, nm in enumerate(names):
            w, b = _init_linear(jax.random.fold_in(hkey, i), feat_dim, feat_dim)
            hp[f"w{nm}"] = w
            hp[f"b{nm}"] = b
        heads.append(hp)
    pw, pb = _init_linear(jax.random.fold_in(key, 10_000),
                          num_heads * feat_dim, feat_dim)
    return {"heads": heads, "proj_w": pw, "proj_b": pb}


def pack_params(params, feat_dim):
    """Pack Q/K/V of both groups and all heads into a [3*2*H, F, F] bf16 stack
    (virtual-head index v = group*H + head; Q scaled by 1/sqrt(d_k)), and the
    projection into a per-virtual-head [2*H, F, F] bf16 stack."""
    heads = params["heads"]
    H = len(heads)
    scale = 1.0 / math.sqrt(float(feat_dim))

    w_list, b_list = [], []
    for prefix in ("q", "k", "v"):
        for suffix in ("wkr", "tsk"):
            for hp in heads:
                w = hp[f"w{prefix}_{suffix}"]
                b = hp[f"b{prefix}_{suffix}"]
                if prefix == "q":
                    w = w * scale
                    b = b * scale
                w_list.append(w)
                b_list.append(b)
    w_qkv = jnp.stack(w_list, axis=0).astype(jnp.bfloat16)       # [3*2*H, F, F]
    b_qkv = jnp.stack(b_list, axis=0).astype(jnp.float32)        # [3*2*H, 1, F]

    wp_heads = [params["proj_w"][h * feat_dim:(h + 1) * feat_dim, :]
                for h in range(H)]
    w_proj = jnp.stack(wp_heads + wp_heads, axis=0).astype(jnp.bfloat16)  # [2*H,F,F]
    b_proj = params["proj_b"].astype(jnp.float32)                         # [1, F]

    return {"w_qkv": w_qkv, "b_qkv": b_qkv, "w_proj": w_proj, "b_proj": b_proj}


# ---------------------------------------------------------------------------
# Pure-JAX reference (matches the PyTorch module semantics, f32)
# ---------------------------------------------------------------------------
def _ref_attn(x, wq, bq, wk, bk, wv, bv):
    q = x @ wq + bq
    k = x @ wk + bk
    v = x @ wv + bv
    s = (q @ k.T) / math.sqrt(q.shape[-1])
    w = jax.nn.softmax(s, axis=-1)
    return w @ v


def _ref_forward(features, params, num_wkr, num_tsk):
    x = features[:, 0, :]
    wkr, tsk = x[:num_wkr], x[num_wkr:num_wkr + num_tsk]
    outs = []
    for hp in params["heads"]:
        nw = _ref_attn(wkr, hp["wq_wkr"], hp["bq_wkr"], hp["wk_wkr"], hp["bk_wkr"],
                       hp["wv_wkr"], hp["bv_wkr"])
        nt = _ref_attn(tsk, hp["wq_tsk"], hp["bq_tsk"], hp["wk_tsk"], hp["bk_tsk"],
                       hp["wv_tsk"], hp["bv_tsk"])
        outs.append(jnp.concatenate([nw, nt], axis=-2))
    o = jnp.concatenate(outs, axis=-1) @ params["proj_w"] + params["proj_b"]
    return o[:, None, :]


# ---------------------------------------------------------------------------
if __name__ == "__main__":
    feat_dim = 32
    num_wkr = 5
    num_tsk = 3
    num_heads = 2
    batch = 4
    num_nodes = num_wkr + num_tsk

    key = jax.random.PRNGKey(0)
    k_feat, k_param = jax.random.split(key)

    features_b = jax.random.normal(k_feat, (batch, num_nodes, 1, feat_dim),
                                   jnp.float32)
    params = init_middle_layer_params(k_param, feat_dim, num_heads)
    packed = pack_params(params, feat_dim)

    # Batched path: one pallas_call, grid over graphs, weights VMEM-resident.
    out_b = middle_layer_forward_batched(features_b, packed, num_wkr, num_tsk,
                                         feat_dim, num_heads)
    out_b = jax.block_until_ready(out_b)
    assert out_b.shape == (batch, num_nodes, 1, feat_dim)

    # bf16 MXU operands + approx softmax reciprocal -> relaxed tolerance.
    for b in range(batch):
        ref = _ref_forward(features_b[b], params, num_wkr, num_tsk)
        assert jnp.allclose(out_b[b], ref, atol=3e-2, rtol=3e-2), \
            f"graph {b}: max err {jnp.max(jnp.abs(out_b[b] - ref))}"

    # Single-graph path (original module signature: [num_nodes, 1, feat]).
    out0 = middle_layer_forward(features_b[0], packed, num_wkr, num_tsk,
                                feat_dim, num_heads)
    out0 = jax.block_until_ready(out0)
    ref0 = _ref_forward(features_b[0], params, num_wkr, num_tsk)
    assert out0.shape == (num_nodes, 1, feat_dim)
    assert jnp.allclose(out0, ref0, atol=3e-2, rtol=3e-2)

    print("KERNEL_OK")
</pallas_src>

<mosaic_0001>
module attributes {stable_mosaic.version = 11 : i64} {
  func.func @_fused_middle_layer_kernel(%arg0: i32, %arg1: memref<1x8x32xbf16, #tpu.memory_space<vmem>>, %arg2: memref<12x32x32xbf16, #tpu.memory_space<vmem>>, %arg3: memref<12x1x32xf32, #tpu.memory_space<vmem>>, %arg4: memref<4x32x32xbf16, #tpu.memory_space<vmem>>, %arg5: memref<1x32xf32, #tpu.memory_space<vmem>>, %arg6: memref<1x8x32xf32, #tpu.memory_space<vmem>>) attributes {dimension_semantics = [#tpu.dimension_semantics<parallel>], iteration_bounds = array<i64: 4>, scalar_prefetch = 0 : i64, scratch_operands = 0 : i64, tpu.core_type = #tpu.core_type<tc>, window_params = [{transform_indices = @transform_0, window_bounds = array<i64: 1, 8, 32>}, {pipeline_mode = #tpu.pipeline_mode<synchronous>, transform_indices = @transform_1, window_bounds = array<i64: 12, 32, 32>}, {pipeline_mode = #tpu.pipeline_mode<synchronous>, transform_indices = @transform_2, window_bounds = array<i64: 12, 1, 32>}, {pipeline_mode = #tpu.pipeline_mode<synchronous>, transform_indices = @transform_3, window_bounds = array<i64: 4, 32, 32>}, {pipeline_mode = #tpu.pipeline_mode<synchronous>, transform_indices = @transform_4, window_bounds = array<i64: 1, 32>}, {transform_indices = @transform_5, window_bounds = array<i64: 1, 8, 32>}]} {
    %c0 = arith.constant 0 : index
    %c0_0 = arith.constant 0 : index
    %c0_1 = arith.constant 0 : index
    %0 = vector.load %arg1[%c0, %c0_0, %c0_1] : memref<1x8x32xbf16, #tpu.memory_space<vmem>>, vector<1x8x32xbf16>
    %1 = vector.shape_cast %0 : vector<1x8x32xbf16> to vector<8x32xbf16>
    %2 = vector.shape_cast %1 : vector<8x32xbf16> to vector<1x8x32xbf16>
    %3 = vector.broadcast %2 : vector<1x8x32xbf16> to vector<12x8x32xbf16>
    %c0_2 = arith.constant 0 : index
    %c0_3 = arith.constant 0 : index
    %c0_4 = arith.constant 0 : index
    %4 = vector.load %arg2[%c0_2, %c0_3, %c0_4] : memref<12x32x32xbf16, #tpu.memory_space<vmem>>, vector<12x32x32xbf16>
    %cst = arith.constant dense<0.000000e+00> : vector<12x8x32xf32>
    %5 = tpu.matmul %3, %4, %cst {dimension_numbers = #tpu.dot_dimension_numbers<[2], [1], [1], [2], [0, 0, 0, 1, 1, 2], [0], [0]>} : vector<12x8x32xbf16>, vector<12x32x32xbf16>, vector<12x8x32xf32> -> vector<12x8x32xf32>
    %c0_5 = arith.constant 0 : index
    %c0_6 = arith.constant 0 : index
    %c0_7 = arith.constant 0 : index
    %6 = vector.load %arg3[%c0_5, %c0_6, %c0_7] : memref<12x1x32xf32, #tpu.memory_space<vmem>>, vector<12x1x32xf32>
    %7 = vector.broadcast %6 : vector<12x1x32xf32> to vector<12x8x32xf32>
    %8 = arith.addf %5, %7 : vector<12x8x32xf32>
    %9 = arith.truncf %8 : vector<12x8x32xf32> to vector<12x8x32xbf16>
    %10 = vector.extract_strided_slice %9 {offsets = [0, 0, 0], sizes = [4, 8, 32], strides = [1, 1, 1]} : vector<12x8x32xbf16> to vector<4x8x32xbf16>
    %11 = vector.extract_strided_slice %9 {offsets = [4, 0, 0], sizes = [4, 8, 32], strides = [1, 1, 1]} : vector<12x8x32xbf16> to vector<4x8x32xbf16>
    %12 = vector.extract_strided_slice %9 {offsets = [8, 0, 0], sizes = [4, 8, 32], strides = [1, 1, 1]} : vector<12x8x32xbf16> to vector<4x8x32xbf16>
    %cst_8 = arith.constant dense<0.000000e+00> : vector<4x8x8xf32>
    %13 = tpu.matmul %10, %11, %cst_8 {dimension_numbers = #tpu.dot_dimension_numbers<[2], [2], [1], [1], [0, 0, 0, 1, 1, 1], [0], [0]>} : vector<4x8x32xbf16>, vector<4x8x32xbf16>, vector<4x8x8xf32> -> vector<4x8x8xf32>
    %14 = tpu.iota {dimensions = array<i32: 0>} : vector<8x8xi32>
    %15 = tpu.iota {dimensions = array<i32: 1>} : vector<8x8xi32>
    %c5_i32 = arith.constant 5 : i32
    %16 = vector.broadcast %c5_i32 : i32 to vector<8x8xi32>
    %17 = arith.cmpi slt, %14, %16 : vector<8x8xi32>
    %c5_i32_9 = arith.constant 5 : i32
    %18 = vector.broadcast %c5_i32_9 : i32 to vector<8x8xi32>
    %19 = arith.cmpi slt, %15, %18 : vector<8x8xi32>
    %20 = arith.xori %17, %19 : vector<8x8xi1>
    %cst_10 = arith.constant dense<true> : vector<8x8xi1>
    %21 = arith.xori %20, %cst_10 : vector<8x8xi1>
    %cst_11 = arith.constant 0.000000e+00 : f32
    %cst_12 = arith.constant -1.000000e+30 : f32
    %22 = vector.broadcast %cst_11 : f32 to vector<8x8xf32>
    %23 = vector.broadcast %cst_12 : f32 to vector<8x8xf32>
    %24 = arith.select %21, %22, %23 : vector<8x8xi1>, vector<8x8xf32>
    %25 = vector.shape_cast %24 : vector<8x8xf32> to vector<1x8x8xf32>
    %26 = vector.broadcast %25 : vector<1x8x8xf32> to vector<4x8x8xf32>
    %27 = arith.addf %13, %26 : vector<4x8x8xf32>
    %cst_13 = arith.constant dense<0xFF800000> : vector<4x8xf32>
    %28 = vector.multi_reduction <maximumf>, %27, %cst_13 [2] : vector<4x8x8xf32> to vector<4x8xf32>
    %29 = vector.shape_cast %28 : vector<4x8xf32> to vector<4x8x1xf32>
    %30 = vector.broadcast %29 : vector<4x8x1xf32> to vector<4x8x8xf32>
    %31 = arith.subf %27, %30 : vector<4x8x8xf32>
    %32 = math.exp %31 : vector<4x8x8xf32>
    %cst_14 = arith.constant dense<0.000000e+00> : vector<4x8xf32>
    %33 = vector.multi_reduction <add>, %32, %cst_14 [2] : vector<4x8x8xf32> to vector<4x8xf32>
    %34 = vector.shape_cast %33 : vector<4x8xf32> to vector<4x8x1xf32>
    %35 = tpu.reciprocal %34 {approx = true} : vector<4x8x1xf32> -> vector<4x8x1xf32>
    %36 = vector.broadcast %35 : vector<4x8x1xf32> to vector<4x8x8xf32>
    %37 = arith.mulf %32, %36 : vector<4x8x8xf32>
    %38 = arith.truncf %37 : vector<4x8x8xf32> to vector<4x8x8xbf16>
    %cst_15 = arith.constant dense<0.000000e+00> : vector<4x8x32xf32>
    %39 = tpu.matmul %38, %12, %cst_15 {dimension_numbers = #tpu.dot_dimension_numbers<[2], [1], [1], [2], [0, 0, 0, 1, 1, 2], [0], [0]>} : vector<4x8x8xbf16>, vector<4x8x32xbf16>, vector<4x8x32xf32> -> vector<4x8x32xf32>
    %40 = arith.truncf %39 : vector<4x8x32xf32> to vector<4x8x32xbf16>
    %c0_16 = arith.constant 0 : index
    %c0_17 = arith.constant 0 : index
    %c0_18 = arith.constant 0 : index
    %41 = vector.load %arg4[%c0_16, %c0_17, %c0_18] : memref<4x32x32xbf16, #tpu.memory_space<vmem>>, vector<4x32x32xbf16>
    %cst_19 = arith.constant dense<0.000000e+00> : vector<4x8x32xf32>
    %42 = tpu.matmul %40, %41, %cst_19 {dimension_numbers = #tpu.dot_dimension_numbers<[2], [1], [1], [2], [0, 0, 0, 1, 1, 2], [0], [0]>} : vector<4x8x32xbf16>, vector<4x32x32xbf16>, vector<4x8x32xf32> -> vector<4x8x32xf32>
    %43 = vector.extract_strided_slice %42 {offsets = [0, 0, 0], sizes = [2, 8, 32], strides = [1, 1, 1]} : vector<4x8x32xf32> to vector<2x8x32xf32>
    %cst_20 = arith.constant dense<0.000000e+00> : vector<8x32xf32>
    %44 = vector.multi_reduction <add>, %43, %cst_20 [0] : vector<2x8x32xf32> to vector<8x32xf32>
    %45 = vector.extract_strided_slice %42 {offsets = [2, 0, 0], sizes = [2, 8, 32], strides = [1, 1, 1]} : vector<4x8x32xf32> to vector<2x8x32xf32>
    %cst_21 = arith.constant dense<0.000000e+00> : vector<8x32xf32>
    %46 = vector.multi_reduction <add>, %45, %cst_21 [0] : vector<2x8x32xf32> to vector<8x32xf32>
    %47 = tpu.iota {dimensions = array<i32: 0>} : vector<8x1xi32>
    %c5_i32_22 = arith.constant 5 : i32
    %48 = vector.broadcast %c5_i32_22 : i32 to vector<8x1xi32>
    %49 = arith.cmpi slt, %47, %48 : vector<8x1xi32>
    %50 = vector.shape_cast %49 : vector<8x1xi1> to vector<8x1xi1>
    %51 = vector.broadcast %50 : vector<8x1xi1> to vector<8x32xi1>
    %52 = arith.select %51, %44, %46 : vector<8x32xi1>, vector<8x32xf32>
    %c0_23 = arith.constant 0 : index
    %c0_24 = arith.constant 0 : index
    %53 = vector.load %arg5[%c0_23, %c0_24] : memref<1x32xf32, #tpu.memory_space<vmem>>, vector<1x32xf32>
    %54 = vector.broadcast %53 : vector<1x32xf32> to vector<8x32xf32>
    %55 = arith.addf %52, %54 : vector<8x32xf32>
    %c0_25 = arith.constant 0 : index
    %c0_26 = arith.constant 0 : index
    %c0_27 = arith.constant 0 : index
    %56 = vector.load %arg6[%c0_25, %c0_26, %c0_27] : memref<1x8x32xf32, #tpu.memory_space<vmem>>, vector<1x8x32xf32>
    %57 = vector.shape_cast %56 : vector<1x8x32xf32> to vector<8x32xf32>
    %58 = vector.shape_cast %55 : vector<8x32xf32> to vector<1x8x32xf32>
    tpu.vector_store %arg6[%c0_25, %c0_26, %c0_27], %58 {strides = array<i32>} : memref<1x8x32xf32, #tpu.memory_space<vmem>>, vector<1x8x32xf32>,
    return
  }
  func.func @transform_0(%arg0: i32) -> (i32, i32, i32) {
    %c0_i32 = arith.constant 0 : i32
    %c0_i32_0 = arith.constant 0 : i32
    %c0_i32_1 = arith.constant 0 : i32
    return %arg0, %c0_i32, %c0_i32_0 : i32, i32, i32
  }
  func.func @transform_1(%arg0: i32) -> (i32, i32, i32) {
    %c0_i32 = arith.constant 0 : i32
    %c0_i32_0 = arith.constant 0 : i32
    %c0_i32_1 = arith.constant 0 : i32
    %c0_i32_2 = arith.constant 0 : i32
    return %c0_i32, %c0_i32_0, %c0_i32_1 : i32, i32, i32
  }
  func.func @transform_2(%arg0: i32) -> (i32, i32, i32) {
    %c0_i32 = arith.constant 0 : i32
    %c0_i32_0 = arith.constant 0 : i32
    %c0_i32_1 = arith.constant 0 : i32
    %c0_i32_2 = arith.constant 0 : i32
    return %c0_i32, %c0_i32_0, %c0_i32_1 : i32, i32, i32
  }
  func.func @transform_3(%arg0: i32) -> (i32, i32, i32) {
    %c0_i32 = arith.constant 0 : i32
    %c0_i32_0 = arith.constant 0 : i32
    %c0_i32_1 = arith.constant 0 : i32
    %c0_i32_2 = arith.constant 0 : i32
    return %c0_i32, %c0_i32_0, %c0_i32_1 : i32, i32, i32
  }
  func.func @transform_4(%arg0: i32) -> (i32, i32) {
    %c0_i32 = arith.constant 0 : i32
    %c0_i32_0 = arith.constant 0 : i32
    %c0_i32_1 = arith.constant 0 : i32
    return %c0_i32, %c0_i32_0 : i32, i32
  }
  func.func @transform_5(%arg0: i32) -> (i32, i32, i32) {
    %c0_i32 = arith.constant 0 : i32
    %c0_i32_0 = arith.constant 0 : i32
    %c0_i32_1 = arith.constant 0 : i32
    return %arg0, %c0_i32, %c0_i32_0 : i32, i32, i32
  }
}

</mosaic_0001>

<llo_original>
// kernel: tpu_custom_call.1
$region0: #{tpu_custom_call.1}
  #allocation0 [shape = 'u32[]', space=smem, size = 0x4, offset = 0x4, fixed_abs, tag = 'smem constant byte address 0x4 - core index']
  #allocation1 [shape = 'u32[144,128]{1,0:T(1,128)}', space=vmem, size = 0x12000, scoped, tag = 'internal scratch']
  %s0 = inlined_call_operand.hbm [shape: bf16[4,8,32], index: 0, kind: input, shape index: {}]
  %s1 = inlined_call_operand.hbm [shape: bf16[12,32,32], index: 1, kind: input, shape index: {}]
  %s2 = inlined_call_operand.hbm [shape: f32[12,1,32], index: 2, kind: input, shape index: {}]
  %s3 = inlined_call_operand.hbm [shape: bf16[4,32,32], index: 3, kind: input, shape index: {}]
  %s4 = inlined_call_operand.vmem [shape: f32[1,32], index: 4, kind: input, shape index: {}]
  %s5 = inlined_call_operand.hbm [shape: f32[4,8,32], index: 5, kind: output, shape index: {}]
  %s6 = sld [smem:[#allocation0]]
  $region69: #{tpu_custom_call.1} parent=0
    _
  %s8 = ssub.s32 1, %s6
  %s9 = scalar_select 0, %s8, %s6
  $region1: #{tpu_custom_call.1} parent=0
    #allocation2 [shape = 'u8[4096]{0}', space=vmem, size = 0x1000, scoped, tag = 'input window, operand 0']
    #allocation3 [shape = 's32[2]{0}', space=sflag, size = 0x8, scoped, tag = 'scoped memory for tpu_custom_call.1']
    #allocation4 [shape = 's32[2]{0}', space=sflag, size = 0x8, scoped, tag = 'scoped memory for tpu_custom_call.1']
    #allocation5 [shape = 'u8[98304]{0}', space=vmem, size = 0x18000, scoped, tag = 'input window, operand 1, single buffered']
    #allocation6 [shape = 's32[1]{0}', space=sflag, size = 0x4, scoped, tag = 'scoped memory for tpu_custom_call.1']
    #allocation7 [shape = 'u8[6144]{0}', space=vmem, size = 0x1800, scoped, tag = 'input window, operand 2, single buffered']
    #allocation8 [shape = 'u8[32768]{0}', space=vmem, size = 0x8000, scoped, tag = 'input window, operand 3, single buffered']
    #allocation9 [shape = 's32[1]{0}', space=sflag, size = 0x4, scoped, tag = 'scoped memory for tpu_custom_call.1']
    #allocation10 [shape = 'u8[8192]{0}', space=vmem, size = 0x2000, scoped, tag = 'output window, operand 0']
    %10 = vsyncpa [#allocation3], 0
    %s11 = scalar_lea.sflag [#allocation3], 1
    %12 = vsyncpa %s11, 0
    %13 = vsyncpa [#allocation6], 0
    %14 = vsyncpa [#allocation9], 0
    %15 = vsyncpa [#allocation4], 0
    %s16 = scalar_lea.sflag [#allocation4], 1
    %17 = vsyncpa %s16, 0
    loop: start=0, step=1, limit=6
    $region2: #{tpu_custom_call.1} parent=1 // loop_pre_header
      _
    $region3: #{tpu_custom_call.1} parent=1 // loop_header
      %s19 = sphi 0, %s23
      %p20 = scmp.ge.s32.totalorder %s19, 6
      %s29 = sphi 0, %s31
      %s32 = sphi 0, %s29
      %s33 = sphi 0, %s32
      %s49 = sphi 0, %s33
      %s53 = sphi 0, %s53
      %s55 = sphi 0, %s53
      %s56 = sphi 0, %s55
      %s70 = sphi 0, %s56
      %s74 = sphi 0, %s74
      %s76 = sphi 0, %s74
      %s77 = sphi 0, %s76
      %s91 = sphi 0, %s77
      %s95 = sphi 0, %s95
      %s97 = sphi 0, %s95
      %s98 = sphi 0, %s97
      %s112 = sphi 0, %s98
      %s116 = sphi 0, %s116
      %s118 = sphi 0, %s116
      %s119 = sphi 0, %s118
      %s133 = sphi 0, %s119
      %s139 = sphi 0, %s141
      %s142 = sphi 0, %s139
      %s143 = sphi 0, %s142
      %s159 = sphi 0, %s143
    $region4: #{tpu_custom_call.1} parent=1 // loop_header_branch
      %22 = sbr.rel (%p20) target = $region8
    $region5: #{tpu_custom_call.1} parent=1 // loop_body
      %s24 = ssub.s32 %s19, 1
      %s25 = ssub.s32 %s19, 2
      %s26 = sadd.s32 %s19, 1
      %s27 = ssub.s32 %s19, %s26
      %p28 = scmp.eq.s32.totalorder %s27, 0
      %s30 = sadd.s32 %s29, 1
      %s31 = scalar_select %p28, %s29, %s30
      %p34 = pneg %p28
      %p35 = scmp.eq.s32.totalorder %s19, 3
      %p36 = por %p34, %p35
      %p37 = scmp.ne.s32.totalorder %s29, %s32
      %p38 = scmp.eq.s32.totalorder %s19, 0
      %p39 = por %p37, %p38
      %p40 = scmp.ne.s32.totalorder %s29, %s32
      %p41 = scmp.eq.s32.totalorder %s24, 3
      %p42 = por %p40, %p41
      %p43 = scmp.ne.s32.totalorder %s32, %s33
      %p44 = scmp.eq.s32.totalorder %s24, 0
      %p45 = por %p43, %p44
      %p46 = scmp.ne.s32.totalorder %s32, %s33
      %p47 = scmp.eq.s32.totalorder %s25, 3
      %p48 = por %p46, %p47
      %p50 = scmp.ne.s32.totalorder %s33, %s49
      %p51 = scmp.eq.s32.totalorder %s25, 0
      %p52 = por %p50, %p51
      %s54 = sadd.s32 %s53, 1
      %p57 = scmp.eq.s32.totalorder %s19, 3
      %p58 = scmp.ne.s32.totalorder %s53, %s55
      %p59 = scmp.eq.s32.totalorder %s19, 0
      %p60 = por %p58, %p59
      %p61 = scmp.ne.s32.totalorder %s53, %s55
      %p62 = scmp.eq.s32.totalorder %s24, 3
      %p63 = por %p61, %p62
      %p64 = scmp.ne.s32.totalorder %s55, %s56
      %p65 = scmp.eq.s32.totalorder %s24, 0
      %p66 = por %p64, %p65
      %p67 = scmp.ne.s32.totalorder %s55, %s56
      %p68 = scmp.eq.s32.totalorder %s25, 3
      %p69 = por %p67, %p68
      %p71 = scmp.ne.s32.totalorder %s56, %s70
      %p72 = scmp.eq.s32.totalorder %s25, 0
      %p73 = por %p71, %p72
      %s75 = sadd.s32 %s74, 1
      %p78 = scmp.eq.s32.totalorder %s19, 3
      %p79 = scmp.ne.s32.totalorder %s74, %s76
      %p80 = scmp.eq.s32.totalorder %s19, 0
      %p81 = por %p79, %p80
      %p82 = scmp.ne.s32.totalorder %s74, %s76
      %p83 = scmp.eq.s32.totalorder %s24, 3
      %p84 = por %p82, %p83
      %p85 = scmp.ne.s32.totalorder %s76, %s77
      %p86 = scmp.eq.s32.totalorder %s24, 0
      %p87 = por %p85, %p86
      %p88 = scmp.ne.s32.totalorder %s76, %s77
      %p89 = scmp.eq.s32.totalorder %s25, 3
      %p90 = por %p88, %p89
      %p92 = scmp.ne.s32.totalorder %s77, %s91
      %p93 = scmp.eq.s32.totalorder %s25, 0
      %p94 = por %p92, %p93
      %s96 = sadd.s32 %s95, 1
      %p99 = scmp.eq.s32.totalorder %s19, 3
      %p100 = scmp.ne.s32.totalorder %s95, %s97
      %p101 = scmp.eq.s32.totalorder %s19, 0
      %p102 = por %p100, %p101
      %p103 = scmp.ne.s32.totalorder %s95, %s97
      %p104 = scmp.eq.s32.totalorder %s24, 3
      %p105 = por %p103, %p104
      %p106 = scmp.ne.s32.totalorder %s97, %s98
      %p107 = scmp.eq.s32.totalorder %s24, 0
      %p108 = por %p106, %p107
      %p109 = scmp.ne.s32.totalorder %s97, %s98
      %p110 = scmp.eq.s32.totalorder %s25, 3
      %p111 = por %p109, %p110
      %p113 = scmp.ne.s32.totalorder %s98, %s112
      %p114 = scmp.eq.s32.totalorder %s25, 0
      %p115 = por %p113, %p114
      %s117 = sadd.s32 %s116, 1
      %p120 = scmp.eq.s32.totalorder %s19, 3
      %p121 = scmp.ne.s32.totalorder %s116, %s118
      %p122 = scmp.eq.s32.totalorder %s19, 0
      %p123 = por %p121, %p122
      %p124 = scmp.ne.s32.totalorder %s116, %s118
      %p125 = scmp.eq.s32.totalorder %s24, 3
      %p126 = por %p124, %p125
      %p127 = scmp.ne.s32.totalorder %s118, %s119
      %p128 = scmp.eq.s32.totalorder %s24, 0
      %p129 = por %p127, %p128
      %p130 = scmp.ne.s32.totalorder %s118, %s119
      %p131 = scmp.eq.s32.totalorder %s25, 3
      %p132 = por %p130, %p131
      %p134 = scmp.ne.s32.totalorder %s119, %s133
      %p135 = scmp.eq.s32.totalorder %s25, 0
      %p136 = por %p134, %p135
      %s137 = ssub.s32 %s19, %s26
      %p138 = scmp.eq.s32.totalorder %s137, 0
      %s140 = sadd.s32 %s139, 1
      %s141 = scalar_select %p138, %s139, %s140
      %p144 = pneg %p138
      %p145 = scmp.eq.s32.totalorder %s19, 3
      %p146 = por %p144, %p145
      %p147 = scmp.ne.s32.totalorder %s139, %s142
      %p148 = scmp.eq.s32.totalorder %s19, 0
      %p149 = por %p147, %p148
      %p150 = scmp.ne.s32.totalorder %s139, %s142
      %p151 = scmp.eq.s32.totalorder %s24, 3
      %p152 = por %p150, %p151
      %p153 = scmp.ne.s32.totalorder %s142, %s143
      %p154 = scmp.eq.s32.totalorder %s24, 0
      %p155 = por %p153, %p154
      %p156 = scmp.ne.s32.totalorder %s142, %s143
      %p157 = scmp.eq.s32.totalorder %s25, 3
      %p158 = por %p156, %p157
      %p160 = scmp.ne.s32.totalorder %s143, %s159
      %p161 = scmp.eq.s32.totalorder %s25, 0
      %p162 = por %p160, %p161
      %p163 = scmp.le.s32.totalorder 1, %s19
      %p164 = scmp.lt.s32.totalorder %s19, 5
      %p165 = pnand %p163, %p164
      %p166 = pneg %p165
      // Predicated region
      $region9: #{tpu_custom_call.1} parent=5 // pred_check
        _
      $region10: #{tpu_custom_call.1} parent=5 // pred_check_branch
        %168 = sbr.rel (%p165) target = $region12
      $region11: #{tpu_custom_call.1} parent=5 // pred_region
        %s169 = ssub.s32 %s19, 1
        // Predicated region
        $region13: #{tpu_custom_call.1} parent=11 // pred_check
          %p170 = pneg %p66
        $region14: #{tpu_custom_call.1} parent=11 // pred_check_branch
          %172 = sbr.rel (%p170) target = $region16
        $region15: #{tpu_custom_call.1} parent=11 // pred_region
          %s174 = ssub.s32 3072, 3072
          %175 = vsyncadd [#allocation6], %s174
          %s176 = sshll.u32 [#allocation5], 4
          %s177 = int_to_ptr.vmem [resolvable:$true] %s176
          %182 = dma.hbm_to_vmem [thread:$0]  %s1, 3072, %s177, [#allocation6], 64, 64, 4
        $region16: #{tpu_custom_call.1} parent=11 // pred_fallthru
          _
        // Predicated region
        $region17: #{tpu_custom_call.1} parent=11 // pred_check
          %p183 = pneg %p87
        $region18: #{tpu_custom_call.1} parent=11 // pred_check_branch
          %185 = sbr.rel (%p183) target = $region20
        $region19: #{tpu_custom_call.1} parent=11 // pred_region
          %s187 = ssub.s32 192, 192
          %188 = vsyncadd [#allocation6], %s187
          %s189 = sshll.u32 [#allocation7], 4
          %s190 = int_to_ptr.vmem [resolvable:$true] %s189
          %195 = dma.hbm_to_vmem [thread:$0]  %s2, 192, %s190, [#allocation6], 16, 16, 1
        $region20: #{tpu_custom_call.1} parent=11 // pred_fallthru
          _
        // Predicated region
        $region21: #{tpu_custom_call.1} parent=11 // pred_check
          %p196 = pneg %p108
        $region22: #{tpu_custom_call.1} parent=11 // pred_check_branch
          %198 = sbr.rel (%p196) target = $region24
        $region23: #{tpu_custom_call.1} parent=11 // pred_region
          %s200 = ssub.s32 1024, 1024
          %201 = vsyncadd [#allocation9], %s200
          %s202 = sshll.u32 [#allocation8], 4
          %s203 = int_to_ptr.vmem [resolvable:$true] %s202
          %208 = dma.hbm_to_vmem [thread:$0]  %s3, 1024, %s203, [#allocation9], 64, 64, 4
        $region24: #{tpu_custom_call.1} parent=11 // pred_fallthru
          _
        // Predicated region
        $region25: #{tpu_custom_call.1} parent=11 // pred_check
          %p209 = pneg %p129
        $region26: #{tpu_custom_call.1} parent=11 // pred_check_branch
          %211 = sbr.rel (%p209) target = $region28
        $region27: #{tpu_custom_call.1} parent=11 // pred_region
          _
        $region28: #{tpu_custom_call.1} parent=11 // pred_fallthru
          _
      $region12: #{tpu_custom_call.1} parent=5 // pred_fallthru
        _
      %p212 = scmp.lt.s32.totalorder %s19, 4
      // Predicated region
      $region29: #{tpu_custom_call.1} parent=5 // pred_check
        %p213 = pneg %p212
      $region30: #{tpu_custom_call.1} parent=5 // pred_check_branch
        %215 = sbr.rel (%p213) target = $region32
      $region31: #{tpu_custom_call.1} parent=5 // pred_region
        // Predicated region
        $region33: #{tpu_custom_call.1} parent=31 // pred_check
          %p216 = pneg %p39
        $region34: #{tpu_custom_call.1} parent=31 // pred_check_branch
          %218 = sbr.rel (%p216) target = $region36
        $region35: #{tpu_custom_call.1} parent=31 // pred_region
          %s219 = sand.u32 %s29, 1
          %s220 = scalar_lea.sflag [#allocation3], %s219
          %s221 = sand.u32 %s29, 1
          %s222 = smul.addr %s221, 4
          %s223 = scalar_lea.vmem [#allocation2], %s222
          %s225 = ssub.s32 64, 64
          %226 = vsyncadd %s220, %s225
          %s227 = smul.addr %s19, 64
          %s228 = scalar_lea.hbm %s0, %s227
          %s230 = sshll.u32 %s223, 4
          %s231 = int_to_ptr.vmem [resolvable:$true] %s230
          %233 = dma.hbm_to_vmem [thread:$0]  %s228, 64, %s231, %s220
        $region36: #{tpu_custom_call.1} parent=31 // pred_fallthru
          _
      $region32: #{tpu_custom_call.1} parent=5 // pred_fallthru
        _
      %p234 = scmp.le.s32.totalorder 1, %s19
      %p235 = scmp.lt.s32.totalorder %s19, 5
      %p236 = pnand %p234, %p235
      %p237 = pneg %p236
      // Predicated region
      $region37: #{tpu_custom_call.1} parent=5 // pred_check
        _
      $region38: #{tpu_custom_call.1} parent=5 // pred_check_branch
        %239 = sbr.rel (%p236) target = $region40
      $region39: #{tpu_custom_call.1} parent=5 // pred_region
        %s240 = ssub.s32 %s19, 1
        %s241 = sand.u32 %s32, 1
        %s242 = scalar_lea.sflag [#allocation3], %s241
        %s243 = sand.u32 %s32, 1
        %s244 = smul.addr %s243, 4
        %s245 = scalar_lea.vmem [#allocation2], %s244
        // Predicated region
        $region41: #{tpu_custom_call.1} parent=39 // pred_check
          %p246 = pneg %p45
        $region42: #{tpu_custom_call.1} parent=39 // pred_check_branch
          %248 = sbr.rel (%p246) target = $region44
        $region43: #{tpu_custom_call.1} parent=39 // pred_region
          %249 = dma.done %s242, 64
        $region44: #{tpu_custom_call.1} parent=39 // pred_fallthru
          _
        // Predicated region
        $region45: #{tpu_custom_call.1} parent=39 // pred_check
          %p250 = pneg %p66
        $region46: #{tpu_custom_call.1} parent=39 // pred_check_branch
          %252 = sbr.rel (%p250) target = $region48
        $region47: #{tpu_custom_call.1} parent=39 // pred_region
          %253 = dma.done [#allocation6], 3072
        $region48: #{tpu_custom_call.1} parent=39 // pred_fallthru
          _
        // Predicated region
        $region49: #{tpu_custom_call.1} parent=39 // pred_check
          %p254 = pneg %p87
        $region50: #{tpu_custom_call.1} parent=39 // pred_check_branch
          %256 = sbr.rel (%p254) target = $region52
        $region51: #{tpu_custom_call.1} parent=39 // pred_region
          %257 = dma.done [#allocation6], 192
        $region52: #{tpu_custom_call.1} parent=39 // pred_fallthru
          _
        // Predicated region
        $region53: #{tpu_custom_call.1} parent=39 // pred_check
          %p258 = pneg %p108
        $region54: #{tpu_custom_call.1} parent=39 // pred_check_branch
          %260 = sbr.rel (%p258) target = $region56
        $region55: #{tpu_custom_call.1} parent=39 // pred_region
          %261 = dma.done [#allocation9], 1024
        $region56: #{tpu_custom_call.1} parent=39 // pred_fallthru
          _
        %s262 = sand.u32 %s32, 1
        %s263 = scalar_lea.sflag [#allocation3], %s262
        %s264 = sand.u32 %s32, 1
        %s265 = smul.addr %s264, 4
        %s266 = scalar_lea.vmem [#allocation2], %s265
        %p267 = pneg %p45
        %p268 = pneg %p42
        %p269 = pneg %p66
        %p270 = pneg %p63
        %p271 = pneg %p87
        %p272 = pneg %p84
        %p273 = pneg %p108
        %p274 = pneg %p105
        %p275 = pneg %p129
        %p276 = pneg %p126
        %p277 = pneg %p155
        %p278 = pneg %p152
        %s279 = sand.u32 %s142, 1
        %s280 = scalar_lea.sflag [#allocation4], %s279
        %s281 = sand.u32 %s142, 1
        %s282 = smul.addr %s281, 8
        %s283 = scalar_lea.vmem [#allocation10], %s282
        %v285 = vld [vmem:[%s245] sm:$0xf]
        %v286 = vld [vmem:[#allocation5] sm:$0xf]
        %v287 = vld [vmem:[#allocation5 + $0x4] sm:$0xf]
        %v288 = vld [vmem:[#allocation5 + $0x8] sm:$0xf]
        %v289 = vld [vmem:[#allocation5 + $0xc] sm:$0xf]
        %v290 = vld [vmem:[#allocation5 + $0x10] sm:$0xf]
        %v291 = vld [vmem:[#allocation5 + $0x14] sm:$0xf]
        %v292 = vld [vmem:[#allocation5 + $0x18] sm:$0xf]
        %v293 = vld [vmem:[#allocation5 + $0x1c] sm:$0xf]
        %v294 = vld [vmem:[#allocation5 + $0x20] sm:$0xf]
        %v295 = vld [vmem:[#allocation5 + $0x24] sm:$0xf]
        %v296 = vld [vmem:[#allocation5 + $0x28] sm:$0xf]
        %v297 = vld [vmem:[#allocation5 + $0x2c] sm:$0xf]
        %v298 = vld [vmem:[#allocation5 + $0x30] sm:$0xf]
        %v299 = vld [vmem:[#allocation5 + $0x34] sm:$0xf]
        %v300 = vld [vmem:[#allocation5 + $0x38] sm:$0xf]
        %v301 = vld [vmem:[#allocation5 + $0x3c] sm:$0xf]
        %v302 = vld [vmem:[#allocation5 + $0x40] sm:$0xf]
        %v303 = vld [vmem:[#allocation5 + $0x44] sm:$0xf]
        %v304 = vld [vmem:[#allocation5 + $0x48] sm:$0xf]
        %v305 = vld [vmem:[#allocation5 + $0x4c] sm:$0xf]
        %v306 = vld [vmem:[#allocation5 + $0x50] sm:$0xf]
        %v307 = vld [vmem:[#allocation5 + $0x54] sm:$0xf]
        %v308 = vld [vmem:[#allocation5 + $0x58] sm:$0xf]
        %v309 = vld [vmem:[#allocation5 + $0x5c] sm:$0xf]
        %v310 = vld [vmem:[#allocation5 + $0x60] sm:$0xf]
        %v311 = vld [vmem:[#allocation5 + $0x64] sm:$0xf]
        %v312 = vld [vmem:[#allocation5 + $0x68] sm:$0xf]
        %v313 = vld [vmem:[#allocation5 + $0x6c] sm:$0xf]
        %v314 = vld [vmem:[#allocation5 + $0x70] sm:$0xf]
        %v315 = vld [vmem:[#allocation5 + $0x74] sm:$0xf]
        %v316 = vld [vmem:[#allocation5 + $0x78] sm:$0xf]
        %v317 = vld [vmem:[#allocation5 + $0x7c] sm:$0xf]
        %v318 = vld [vmem:[#allocation5 + $0x80] sm:$0xf]
        %v319 = vld [vmem:[#allocation5 + $0x84] sm:$0xf]
        %v320 = vld [vmem:[#allocation5 + $0x88] sm:$0xf]
        %v321 = vld [vmem:[#allocation5 + $0x8c] sm:$0xf]
        %v322 = vld [vmem:[#allocation5 + $0x90] sm:$0xf]
        %v323 = vld [vmem:[#allocation5 + $0x94] sm:$0xf]
        %v324 = vld [vmem:[#allocation5 + $0x98] sm:$0xf]
        %v325 = vld [vmem:[#allocation5 + $0x9c] sm:$0xf]
        %v326 = vld [vmem:[#allocation5 + $0xa0] sm:$0xf]
        %v327 = vld [vmem:[#allocation5 + $0xa4] sm:$0xf]
        %v328 = vld [vmem:[#allocation5 + $0xa8] sm:$0xf]
        %v329 = vld [vmem:[#allocation5 + $0xac] sm:$0xf]
        %v330 = vld [vmem:[#allocation5 + $0xb0] sm:$0xf]
        %v331 = vld [vmem:[#allocation5 + $0xb4] sm:$0xf]
        %v332 = vld [vmem:[#allocation5 + $0xb8] sm:$0xf]
        %v333 = vld [vmem:[#allocation5 + $0xbc] sm:$0xf]
        %v334 = vld [vmem:[#allocation7] sm:$0x1]
        %v335 = vld [vmem:[#allocation7 + $0x1] sm:$0x1]
        %v336 = vld [vmem:[#allocation7 + $0x2] sm:$0x1]
        %v337 = vld [vmem:[#allocation7 + $0x3] sm:$0x1]
        %v338 = vld [vmem:[#allocation7 + $0x4] sm:$0x1]
        %v339 = vld [vmem:[#allocation7 + $0x5] sm:$0x1]
        %v340 = vld [vmem:[#allocation7 + $0x6] sm:$0x1]
        %v341 = vld [vmem:[#allocation7 + $0x7] sm:$0x1]
        %v342 = vld [vmem:[#allocation7 + $0x8] sm:$0x1]
        %v343 = vld [vmem:[#allocation7 + $0x9] sm:$0x1]
        %v344 = vld [vmem:[#allocation7 + $0xa] sm:$0x1]
        %v345 = vld [vmem:[#allocation7 + $0xb] sm:$0x1]
        %v358 = vlaneseq
        %v359 = vshrl.u32 %v358, 7
        %v360 = vsub.s32 0, %v359
        %v361 = vrot.slane %v334, %v360
        %v362 = vlaneseq
        %v363 = vshrl.u32 %v362, 7
        %v364 = vsub.s32 0, %v363
        %v365 = vrot.slane %v335, %v364
        %v366 = vlaneseq
        %v367 = vshrl.u32 %v366, 7
        %v368 = vsub.s32 0, %v367
        %v369 = vrot.slane %v336, %v368
        %v370 = vlaneseq
        %v371 = vshrl.u32 %v370, 7
        %v372 = vsub.s32 0, %v371
        %v373 = vrot.slane %v337, %v372
        %v374 = vlaneseq
        %v375 = vshrl.u32 %v374, 7
        %v376 = vsub.s32 0, %v375
        %v377 = vrot.slane %v338, %v376
        %v378 = vlaneseq
        %v379 = vshrl.u32 %v378, 7
        %v380 = vsub.s32 0, %v379
        %v381 = vrot.slane %v339, %v380
        %v382 = vlaneseq
        %v383 = vshrl.u32 %v382, 7
        %v384 = vsub.s32 0, %v383
        %v385 = vrot.slane %v340, %v384
        %v386 = vlaneseq
        %v387 = vshrl.u32 %v386, 7
        %v388 = vsub.s32 0, %v387
        %v389 = vrot.slane %v341, %v388
        %v390 = vlaneseq
        %v391 = vshrl.u32 %v390, 7
        %v392 = vsub.s32 0, %v391
        %v393 = vrot.slane %v342, %v392
        %v394 = vlaneseq
        %v395 = vshrl.u32 %v394, 7
        %v396 = vsub.s32 0, %v395
        %v397 = vrot.slane %v343, %v396
        %v398 = vlaneseq
        %v399 = vshrl.u32 %v398, 7
        %v400 = vsub.s32 0, %v399
        %v401 = vrot.slane %v344, %v400
        %v402 = vlaneseq
        %v403 = vshrl.u32 %v402, 7
        %v404 = vsub.s32 0, %v403
        %v405 = vrot.slane %v345, %v404
        %v422 = vunpack.c.l.b16 %v286
        %v423 = vunpack.c.l.b16 %v287
        %v424 = vunpack.c.l.b16 %v288
        %v425 = vunpack.c.l.b16 %v289
        %v426 = vpack.c.b16 %v423, %v422
        %v427 = vpack.c.b16 %v425, %v424
        %vm430 = vcmask 261120
        %v432 = vsel %vm430, %v285, 0
        %434 = vmatprep.subr.bf16.mxu0 0
        %435 = vmatpush1.bf16.msra.mxu0 %v426
        %436 = vmatprep.subr.bf16.mxu0 0
        %437 = vmatpush1.bf16.msra.mxu0 %v427
        %438 = vmatprep.subr.bf16.mxu0 0
        %439 = vmatpush1.bf16.msra.mxu0 0
        %440 = vmatprep.subr.bf16.mxu0 0
        %441 = vmatpush1.bf16.msra.mxu0 0
        %442 = vmatprep.subr.bf16.mxu0 0
        %443 = vmatpush1.bf16.msra.mxu0 0
        %444 = vmatprep.subr.bf16.mxu0 0
        %445 = vmatpush1.bf16.msra.mxu0 0
        %446 = vmatprep.subr.bf16.mxu0 0
        %447 = vmatpush1.bf16.msra.mxu0 0
        %448 = vmatprep.subr.bf16.mxu0 0
        %449 = vmatpush1.bf16.msra.mxu0 0
        %450 = vmatprep.subr.bf16.mxu0 0
        %451 = vmatpush1.bf16.msra.mxu0 0
        %452 = vmatprep.subr.bf16.mxu0 0
        %453 = vmatpush1.bf16.msra.mxu0 0
        %454 = vmatprep.subr.bf16.mxu0 0
        %455 = vmatpush1.bf16.msra.mxu0 0
        %456 = vmatprep.subr.bf16.mxu0 0
        %457 = vmatpush1.bf16.msra.mxu0 0
        %458 = vmatprep.subr.bf16.mxu0 0
        %459 = vmatpush1.bf16.msra.mxu0 0
        %460 = vmatprep.subr.bf16.mxu0 0
        %461 = vmatpush1.bf16.msra.mxu0 0
        %462 = vmatprep.subr.bf16.mxu0 0
        %463 = vmatpush1.bf16.msra.mxu0 0
        %464 = vmatprep.subr.bf16.mxu0 0
        %465 = vmatpush1.bf16.msra.mxu0 0
        %466 = vmatprep.mubr.bf16.mxu0 0
        %467 = vmatmul.mubr.bf16.gmra.mrb[0].mxu0 %v432
        %v468 = vpop.f32.mrb[0].mxu0
        %v469 = vadd.f32 %v361, %v468
        %v470 = vpop.f32.mrb[0].mxu0
        %v471 = vpop.f32.mrb[0].mxu0
        %v472 = vpop.f32.mrb[0].mxu0
        %473 = vdwg.mxu0
        %v478 = vunpack.c.l.b16 %v290
        %v479 = vunpack.c.l.b16 %v291
        %v480 = vunpack.c.l.b16 %v292
        %v481 = vunpack.c.l.b16 %v293
        %v482 = vpack.c.b16 %v479, %v478
        %v483 = vpack.c.b16 %v481, %v480
        %486 = vmatprep.subr.bf16.mxu0 0
        %487 = vmatpush1.bf16.msra.mxu0 %v482
        %488 = vmatprep.subr.bf16.mxu0 0
        %489 = vmatpush1.bf16.msra.mxu0 %v483
        %490 = vmatprep.subr.bf16.mxu0 0
        %491 = vmatpush1.bf16.msra.mxu0 0
        %492 = vmatprep.subr.bf16.mxu0 0
        %493 = vmatpush1.bf16.msra.mxu0 0
        %494 = vmatprep.subr.bf16.mxu0 0
        %495 = vmatpush1.bf16.msra.mxu0 0
        %496 = vmatprep.subr.bf16.mxu0 0
        %497 = vmatpush1.bf16.msra.mxu0 0
        %498 = vmatprep.subr.bf16.mxu0 0
        %499 = vmatpush1.bf16.msra.mxu0 0
        %500 = vmatprep.subr.bf16.mxu0 0
        %501 = vmatpush1.bf16.msra.mxu0 0
        %502 = vmatprep.subr.bf16.mxu0 0
        %503 = vmatpush1.bf16.msra.mxu0 0
        %504 = vmatprep.subr.bf16.mxu0 0
        %505 = vmatpush1.bf16.msra.mxu0 0
        %506 = vmatprep.subr.bf16.mxu0 0
        %507 = vmatpush1.bf16.msra.mxu0 0
        %508 = vmatprep.subr.bf16.mxu0 0
        %509 = vmatpush1.bf16.msra.mxu0 0
        %510 = vmatprep.subr.bf16.mxu0 0
        %511 = vmatpush1.bf16.msra.mxu0 0
        %512 = vmatprep.subr.bf16.mxu0 0
        %513 = vmatpush1.bf16.msra.mxu0 0
        %514 = vmatprep.subr.bf16.mxu0 0
        %515 = vmatpush1.bf16.msra.mxu0 0
        %516 = vmatprep.subr.bf16.mxu0 0
        %517 = vmatpush1.bf16.msra.mxu0 0
        %518 = vmatprep.mubr.bf16.mxu0 0
        %519 = vmatmul.mubr.bf16.gmra.mrb[0].mxu0 %v432
        %v520 = vpop.f32.mrb[0].mxu0
        %v521 = vadd.f32 %v365, %v520
        %v522 = vpop.f32.mrb[0].mxu0
        %v523 = vpop.f32.mrb[0].mxu0
        %v524 = vpop.f32.mrb[0].mxu0
        %525 = vdwg.mxu0
        %v530 = vunpack.c.l.b16 %v294
        %v531 = vunpack.c.l.b16 %v295
        %v532 = vunpack.c.l.b16 %v296
        %v533 = vunpack.c.l.b16 %v297
        %v534 = vpack.c.b16 %v531, %v530
        %v535 = vpack.c.b16 %v533, %v532
        %538 = vmatprep.subr.bf16.mxu0 0
        %539 = vmatpush1.bf16.msra.mxu0 %v534
        %540 = vmatprep.subr.bf16.mxu0 0
        %541 = vmatpush1.bf16.msra.mxu0 %v535
        %542 = vmatprep.subr.bf16.mxu0 0
        %543 = vmatpush1.bf16.msra.mxu0 0
        %544 = vmatprep.subr.bf16.mxu0 0
        %545 = vmatpush1.bf16.msra.mxu0 0
        %546 = vmatprep.subr.bf16.mxu0 0
        %547 = vmatpush1.bf16.msra.mxu0 0
        %548 = vmatprep.subr.bf16.mxu0 0
        %549 = vmatpush1.bf16.msra.mxu0 0
        %550 = vmatprep.subr.bf16.mxu0 0
        %551 = vmatpush1.bf16.msra.mxu0 0
        %552 = vmatprep.subr.bf16.mxu0 0
        %553 = vmatpush1.bf16.msra.mxu0 0
        %554 = vmatprep.subr.bf16.mxu0 0
        %555 = vmatpush1.bf16.msra.mxu0 0
        %556 = vmatprep.subr.bf16.mxu0 0
        %557 = vmatpush1.bf16.msra.mxu0 0
        %558 = vmatprep.subr.bf16.mxu0 0
        %559 = vmatpush1.bf16.msra.mxu0 0
        %560 = vmatprep.subr.bf16.mxu0 0
        %561 = vmatpush1.bf16.msra.mxu0 0
        %562 = vmatprep.subr.bf16.mxu0 0
        %563 = vmatpush1.bf16.msra.mxu0 0
        %564 = vmatprep.subr.bf16.mxu0 0
        %565 = vmatpush1.bf16.msra.mxu0 0
        %566 = vmatprep.subr.bf16.mxu0 0
        %567 = vmatpush1.bf16.msra.mxu0 0
        %568 = vmatprep.subr.bf16.mxu0 0
        %569 = vmatpush1.bf16.msra.mxu0 0
        %570 = vmatprep.mubr.bf16.mxu0 0
        %571 = vmatmul.mubr.bf16.gmra.mrb[0].mxu0 %v432
        %v572 = vpop.f32.mrb[0].mxu0
        %v573 = vadd.f32 %v369, %v572
        %v574 = vpop.f32.mrb[0].mxu0
        %v575 = vpop.f32.mrb[0].mxu0
        %v576 = vpop.f32.mrb[0].mxu0
        %577 = vdwg.mxu0
        %v582 = vunpack.c.l.b16 %v298
        %v583 = vunpack.c.l.b16 %v299
        %v584 = vunpack.c.l.b16 %v300
        %v585 = vunpack.c.l.b16 %v301
        %v586 = vpack.c.b16 %v583, %v582
        %v587 = vpack.c.b16 %v585, %v584
        %590 = vmatprep.subr.bf16.mxu0 0
        %591 = vmatpush1.bf16.msra.mxu0 %v586
        %592 = vmatprep.subr.bf16.mxu0 0
        %593 = vmatpush1.bf16.msra.mxu0 %v587
        %594 = vmatprep.subr.bf16.mxu0 0
        %595 = vmatpush1.bf16.msra.mxu0 0
        %596 = vmatprep.subr.bf16.mxu0 0
        %597 = vmatpush1.bf16.msra.mxu0 0
        %598 = vmatprep.subr.bf16.mxu0 0
        %599 = vmatpush1.bf16.msra.mxu0 0
        %600 = vmatprep.subr.bf16.mxu0 0
        %601 = vmatpush1.bf16.msra.mxu0 0
        %602 = vmatprep.subr.bf16.mxu0 0
        %603 = vmatpush1.bf16.msra.mxu0 0
        %604 = vmatprep.subr.bf16.mxu0 0
        %605 = vmatpush1.bf16.msra.mxu0 0
        %606 = vmatprep.subr.bf16.mxu0 0
        %607 = vmatpush1.bf16.msra.mxu0 0
        %608 = vmatprep.subr.bf16.mxu0 0
        %609 = vmatpush1.bf16.msra.mxu0 0
        %610 = vmatprep.subr.bf16.mxu0 0
        %611 = vmatpush1.bf16.msra.mxu0 0
        %612 = vmatprep.subr.bf16.mxu0 0
        %613 = vmatpush1.bf16.msra.mxu0 0
        %614 = vmatprep.subr.bf16.mxu0 0
        %615 = vmatpush1.bf16.msra.mxu0 0
        %616 = vmatprep.subr.bf16.mxu0 0
        %617 = vmatpush1.bf16.msra.mxu0 0
        %618 = vmatprep.subr.bf16.mxu0 0
        %619 = vmatpush1.bf16.msra.mxu0 0
        %620 = vmatprep.subr.bf16.mxu0 0
        %621 = vmatpush1.bf16.msra.mxu0 0
        %622 = vmatprep.mubr.bf16.mxu0 0
        %623 = vmatmul.mubr.bf16.gmra.mrb[0].mxu0 %v432
        %v624 = vpop.f32.mrb[0].mxu0
        %v625 = vadd.f32 %v373, %v624
        %v626 = vpop.f32.mrb[0].mxu0
        %v627 = vpop.f32.mrb[0].mxu0
        %v628 = vpop.f32.mrb[0].mxu0
        %629 = vdwg.mxu0
        %v634 = vunpack.c.l.b16 %v302
        %v635 = vunpack.c.l.b16 %v303
        %v636 = vunpack.c.l.b16 %v304
        %v637 = vunpack.c.l.b16 %v305
        %v638 = vpack.c.b16 %v635, %v634
        %v639 = vpack.c.b16 %v637, %v636
        %642 = vmatprep.subr.bf16.mxu0 0
        %643 = vmatpush1.bf16.msra.mxu0 %v638
        %644 = vmatprep.subr.bf16.mxu0 0
        %645 = vmatpush1.bf16.msra.mxu0 %v639
        %646 = vmatprep.subr.bf16.mxu0 0
        %647 = vmatpush1.bf16.msra.mxu0 0
        %648 = vmatprep.subr.bf16.mxu0 0
        %649 = vmatpush1.bf16.msra.mxu0 0
        %650 = vmatprep.subr.bf16.mxu0 0
        %651 = vmatpush1.bf16.msra.mxu0 0
        %652 = vmatprep.subr.bf16.mxu0 0
        %653 = vmatpush1.bf16.msra.mxu0 0
        %654 = vmatprep.subr.bf16.mxu0 0
        %655 = vmatpush1.bf16.msra.mxu0 0
        %656 = vmatprep.subr.bf16.mxu0 0
        %657 = vmatpush1.bf16.msra.mxu0 0
        %658 = vmatprep.subr.bf16.mxu0 0
        %659 = vmatpush1.bf16.msra.mxu0 0
        %660 = vmatprep.subr.bf16.mxu0 0
        %661 = vmatpush1.bf16.msra.mxu0 0
        %662 = vmatprep.subr.bf16.mxu0 0
        %663 = vmatpush1.bf16.msra.mxu0 0
        %664 = vmatprep.subr.bf16.mxu0 0
        %665 = vmatpush1.bf16.msra.mxu0 0
        %666 = vmatprep.subr.bf16.mxu0 0
        %667 = vmatpush1.bf16.msra.mxu0 0
        %668 = vmatprep.subr.bf16.mxu0 0
        %669 = vmatpush1.bf16.msra.mxu0 0
        %670 = vmatprep.subr.bf16.mxu0 0
        %671 = vmatpush1.bf16.msra.mxu0 0
        %672 = vmatprep.subr.bf16.mxu0 0
        %673 = vmatpush1.bf16.msra.mxu0 0
        %674 = vmatprep.mubr.bf16.mxu0 0
        %675 = vmatmul.mubr.bf16.gmra.mrb[0].mxu0 %v432
        %v676 = vpop.f32.mrb[0].mxu0
        %v677 = vadd.f32 %v377, %v676
        %v678 = vpop.f32.mrb[0].mxu0
        %v679 = vpop.f32.mrb[0].mxu0
        %v680 = vpop.f32.mrb[0].mxu0
        %681 = vdwg.mxu0
        %v686 = vunpack.c.l.b16 %v306
        %v687 = vunpack.c.l.b16 %v307
        %v688 = vunpack.c.l.b16 %v308
        %v689 = vunpack.c.l.b16 %v309
        %v690 = vpack.c.b16 %v687, %v686
        %v691 = vpack.c.b16 %v689, %v688
        %694 = vmatprep.subr.bf16.mxu0 0
        %695 = vmatpush1.bf16.msra.mxu0 %v690
        %696 = vmatprep.subr.bf16.mxu0 0
        %697 = vmatpush1.bf16.msra.mxu0 %v691
        %698 = vmatprep.subr.bf16.mxu0 0
        %699 = vmatpush1.bf16.msra.mxu0 0
        %700 = vmatprep.subr.bf16.mxu0 0
        %701 = vmatpush1.bf16.msra.mxu0 0
        %702 = vmatprep.subr.bf16.mxu0 0
        %703 = vmatpush1.bf16.msra.mxu0 0
        %704 = vmatprep.subr.bf16.mxu0 0
        %705 = vmatpush1.bf16.msra.mxu0 0
        %706 = vmatprep.subr.bf16.mxu0 0
        %707 = vmatpush1.bf16.msra.mxu0 0
        %708 = vmatprep.subr.bf16.mxu0 0
        %709 = vmatpush1.bf16.msra.mxu0 0
        %710 = vmatprep.subr.bf16.mxu0 0
        %711 = vmatpush1.bf16.msra.mxu0 0
        %712 = vmatprep.subr.bf16.mxu0 0
        %713 = vmatpush1.bf16.msra.mxu0 0
        %714 = vmatprep.subr.bf16.mxu0 0
        %715 = vmatpush1.bf16.msra.mxu0 0
        %716 = vmatprep.subr.bf16.mxu0 0
        %717 = vmatpush1.bf16.msra.mxu0 0
        %718 = vmatprep.subr.bf16.mxu0 0
        %719 = vmatpush1.bf16.msra.mxu0 0
        %720 = vmatprep.subr.bf16.mxu0 0
        %721 = vmatpush1.bf16.msra.mxu0 0
        %722 = vmatprep.subr.bf16.mxu0 0
        %723 = vmatpush1.bf16.msra.mxu0 0
        %724 = vmatprep.subr.bf16.mxu0 0
        %725 = vmatpush1.bf16.msra.mxu0 0
        %726 = vmatprep.mubr.bf16.mxu0 0
        %727 = vmatmul.mubr.bf16.gmra.mrb[0].mxu0 %v432
        %v728 = vpop.f32.mrb[0].mxu0
        %v729 = vadd.f32 %v381, %v728
        %v730 = vpop.f32.mrb[0].mxu0
        %v731 = vpop.f32.mrb[0].mxu0
        %v732 = vpop.f32.mrb[0].mxu0
        %733 = vdwg.mxu0
        %v738 = vunpack.c.l.b16 %v310
        %v739 = vunpack.c.l.b16 %v311
        %v740 = vunpack.c.l.b16 %v312
        %v741 = vunpack.c.l.b16 %v313
        %v742 = vpack.c.b16 %v739, %v738
        %v743 = vpack.c.b16 %v741, %v740
        %746 = vmatprep.subr.bf16.mxu0 0
        %747 = vmatpush1.bf16.msra.mxu0 %v742
        %748 = vmatprep.subr.bf16.mxu0 0
        %749 = vmatpush1.bf16.msra.mxu0 %v743
        %750 = vmatprep.subr.bf16.mxu0 0
        %751 = vmatpush1.bf16.msra.mxu0 0
        %752 = vmatprep.subr.bf16.mxu0 0
        %753 = vmatpush1.bf16.msra.mxu0 0
        %754 = vmatprep.subr.bf16.mxu0 0
        %755 = vmatpush1.bf16.msra.mxu0 0
        %756 = vmatprep.subr.bf16.mxu0 0
        %757 = vmatpush1.bf16.msra.mxu0 0
        %758 = vmatprep.subr.bf16.mxu0 0
        %759 = vmatpush1.bf16.msra.mxu0 0
        %760 = vmatprep.subr.bf16.mxu0 0
        %761 = vmatpush1.bf16.msra.mxu0 0
        %762 = vmatprep.subr.bf16.mxu0 0
        %763 = vmatpush1.bf16.msra.mxu0 0
        %764 = vmatprep.subr.bf16.mxu0 0
        %765 = vmatpush1.bf16.msra.mxu0 0
        %766 = vmatprep.subr.bf16.mxu0 0
        %767 = vmatpush1.bf16.msra.mxu0 0
        %768 = vmatprep.subr.bf16.mxu0 0
        %769 = vmatpush1.bf16.msra.mxu0 0
        %770 = vmatprep.subr.bf16.mxu0 0
        %771 = vmatpush1.bf16.msra.mxu0 0
        %772 = vmatprep.subr.bf16.mxu0 0
        %773 = vmatpush1.bf16.msra.mxu0 0
        %774 = vmatprep.subr.bf16.mxu0 0
        %775 = vmatpush1.bf16.msra.mxu0 0
        %776 = vmatprep.subr.bf16.mxu0 0
        %777 = vmatpush1.bf16.msra.mxu0 0
        %778 = vmatprep.mubr.bf16.mxu0 0
        %779 = vmatmul.mubr.bf16.gmra.mrb[0].mxu0 %v432
        %v780 = vpop.f32.mrb[0].mxu0
        %v781 = vadd.f32 %v385, %v780
        %v782 = vpop.f32.mrb[0].mxu0
        %v783 = vpop.f32.mrb[0].mxu0
        %v784 = vpop.f32.mrb[0].mxu0
        %785 = vdwg.mxu0
        %v790 = vunpack.c.l.b16 %v314
        %v791 = vunpack.c.l.b16 %v315
        %v792 = vunpack.c.l.b16 %v316
        %v793 = vunpack.c.l.b16 %v317
        %v794 = vpack.c.b16 %v791, %v790
        %v795 = vpack.c.b16 %v793, %v792
        %798 = vmatprep.subr.bf16.mxu0 0
        %799 = vmatpush1.bf16.msra.mxu0 %v794
        %800 = vmatprep.subr.bf16.mxu0 0
        %801 = vmatpush1.bf16.msra.mxu0 %v795
        %802 = vmatprep.subr.bf16.mxu0 0
        %803 = vmatpush1.bf16.msra.mxu0 0
        %804 = vmatprep.subr.bf16.mxu0 0
        %805 = vmatpush1.bf16.msra.mxu0 0
        %806 = vmatprep.subr.bf16.mxu0 0
        %807 = vmatpush1.bf16.msra.mxu0 0
        %808 = vmatprep.subr.bf16.mxu0 0
        %809 = vmatpush1.bf16.msra.mxu0 0
        %810 = vmatprep.subr.bf16.mxu0 0
        %811 = vmatpush1.bf16.msra.mxu0 0
        %812 = vmatprep.subr.bf16.mxu0 0
        %813 = vmatpush1.bf16.msra.mxu0 0
        %814 = vmatprep.subr.bf16.mxu0 0
        %815 = vmatpush1.bf16.msra.mxu0 0
        %816 = vmatprep.subr.bf16.mxu0 0
        %817 = vmatpush1.bf16.msra.mxu0 0
        %818 = vmatprep.subr.bf16.mxu0 0
        %819 = vmatpush1.bf16.msra.mxu0 0
        %820 = vmatprep.subr.bf16.mxu0 0
        %821 = vmatpush1.bf16.msra.mxu0 0
        %822 = vmatprep.subr.bf16.mxu0 0
        %823 = vmatpush1.bf16.msra.mxu0 0
        %824 = vmatprep.subr.bf16.mxu0 0
        %825 = vmatpush1.bf16.msra.mxu0 0
        %826 = vmatprep.subr.bf16.mxu0 0
        %827 = vmatpush1.bf16.msra.mxu0 0
        %828 = vmatprep.subr.bf16.mxu0 0
        %829 = vmatpush1.bf16.msra.mxu0 0
        %830 = vmatprep.mubr.bf16.mxu0 0
        %831 = vmatmul.mubr.bf16.gmra.mrb[0].mxu0 %v432
        %v832 = vpop.f32.mrb[0].mxu0
        %v833 = vadd.f32 %v389, %v832
        %v834 = vpop.f32.mrb[0].mxu0
        %v835 = vpop.f32.mrb[0].mxu0
        %v836 = vpop.f32.mrb[0].mxu0
        %837 = vdwg.mxu0
        %v842 = vunpack.c.l.b16 %v318
        %v843 = vunpack.c.l.b16 %v319
        %v844 = vunpack.c.l.b16 %v320
        %v845 = vunpack.c.l.b16 %v321
        %v846 = vpack.c.b16 %v843, %v842
        %v847 = vpack.c.b16 %v845, %v844
        %850 = vmatprep.subr.bf16.mxu0 0
        %851 = vmatpush1.bf16.msra.mxu0 %v846
        %852 = vmatprep.subr.bf16.mxu0 0
        %853 = vmatpush1.bf16.msra.mxu0 %v847
        %854 = vmatprep.subr.bf16.mxu0 0
        %855 = vmatpush1.bf16.msra.mxu0 0
        %856 = vmatprep.subr.bf16.mxu0 0
        %857 = vmatpush1.bf16.msra.mxu0 0
        %858 = vmatprep.subr.bf16.mxu0 0
        %859 = vmatpush1.bf16.msra.mxu0 0
        %860 = vmatprep.subr.bf16.mxu0 0
        %861 = vmatpush1.bf16.msra.mxu0 0
        %862 = vmatprep.subr.bf16.mxu0 0
        %863 = vmatpush1.bf16.msra.mxu0 0
        %864 = vmatprep.subr.bf16.mxu0 0
        %865 = vmatpush1.bf16.msra.mxu0 0
        %866 = vmatprep.subr.bf16.mxu0 0
        %867 = vmatpush1.bf16.msra.mxu0 0
        %868 = vmatprep.subr.bf16.mxu0 0
        %869 = vmatpush1.bf16.msra.mxu0 0
        %870 = vmatprep.subr.bf16.mxu0 0
        %871 = vmatpush1.bf16.msra.mxu0 0
        %872 = vmatprep.subr.bf16.mxu0 0
        %873 = vmatpush1.bf16.msra.mxu0 0
        %874 = vmatprep.subr.bf16.mxu0 0
        %875 = vmatpush1.bf16.msra.mxu0 0
        %876 = vmatprep.subr.bf16.mxu0 0
        %877 = vmatpush1.bf16.msra.mxu0 0
        %878 = vmatprep.subr.bf16.mxu0 0
        %879 = vmatpush1.bf16.msra.mxu0 0
        %880 = vmatprep.subr.bf16.mxu0 0
        %881 = vmatpush1.bf16.msra.mxu0 0
        %882 = vmatprep.mubr.bf16.mxu0 0
        %883 = vmatmul.mubr.bf16.gmra.mrb[0].mxu0 %v432
        %v884 = vpop.f32.mrb[0].mxu0
        %v885 = vadd.f32 %v393, %v884
        %v886 = vpop.f32.mrb[0].mxu0
        %v887 = vpop.f32.mrb[0].mxu0
        %v888 = vpop.f32.mrb[0].mxu0
        %889 = vdwg.mxu0
        %v894 = vunpack.c.l.b16 %v322
        %v895 = vunpack.c.l.b16 %v323
        %v896 = vunpack.c.l.b16 %v324
        %v897 = vunpack.c.l.b16 %v325
        %v898 = vpack.c.b16 %v895, %v894
        %v899 = vpack.c.b16 %v897, %v896
        %902 = vmatprep.subr.bf16.mxu0 0
        %903 = vmatpush1.bf16.msra.mxu0 %v898
        %904 = vmatprep.subr.bf16.mxu0 0
        %905 = vmatpush1.bf16.msra.mxu0 %v899
        %906 = vmatprep.subr.bf16.mxu0 0
        %907 = vmatpush1.bf16.msra.mxu0 0
        %908 = vmatprep.subr.bf16.mxu0 0
        %909 = vmatpush1.bf16.msra.mxu0 0
        %910 = vmatprep.subr.bf16.mxu0 0
        %911 = vmatpush1.bf16.msra.mxu0 0
        %912 = vmatprep.subr.bf16.mxu0 0
        %913 = vmatpush1.bf16.msra.mxu0 0
        %914 = vmatprep.subr.bf16.mxu0 0
        %915 = vmatpush1.bf16.msra.mxu0 0
        %916 = vmatprep.subr.bf16.mxu0 0
        %917 = vmatpush1.bf16.msra.mxu0 0
        %918 = vmatprep.subr.bf16.mxu0 0
        %919 = vmatpush1.bf16.msra.mxu0 0
        %920 = vmatprep.subr.bf16.mxu0 0
        %921 = vmatpush1.bf16.msra.mxu0 0
        %922 = vmatprep.subr.bf16.mxu0 0
        %923 = vmatpush1.bf16.msra.mxu0 0
        %924 = vmatprep.subr.bf16.mxu0 0
        %925 = vmatpush1.bf16.msra.mxu0 0
        %926 = vmatprep.subr.bf16.mxu0 0
        %927 = vmatpush1.bf16.msra.mxu0 0
        %928 = vmatprep.subr.bf16.mxu0 0
        %929 = vmatpush1.bf16.msra.mxu0 0
        %930 = vmatprep.subr.bf16.mxu0 0
        %931 = vmatpush1.bf16.msra.mxu0 0
        %932 = vmatprep.subr.bf16.mxu0 0
        %933 = vmatpush1.bf16.msra.mxu0 0
        %934 = vmatprep.mubr.bf16.mxu0 0
        %935 = vmatmul.mubr.bf16.gmra.mrb[0].mxu0 %v432
        %v936 = vpop.f32.mrb[0].mxu0
        %v937 = vadd.f32 %v397, %v936
        %v938 = vpop.f32.mrb[0].mxu0
        %v939 = vpop.f32.mrb[0].mxu0
        %v940 = vpop.f32.mrb[0].mxu0
        %941 = vdwg.mxu0
        %v946 = vunpack.c.l.b16 %v326
        %v947 = vunpack.c.l.b16 %v327
        %v948 = vunpack.c.l.b16 %v328
        %v949 = vunpack.c.l.b16 %v329
        %v950 = vpack.c.b16 %v947, %v946
        %v951 = vpack.c.b16 %v949, %v948
        %954 = vmatprep.subr.bf16.mxu0 0
        %955 = vmatpush1.bf16.msra.mxu0 %v950
        %956 = vmatprep.subr.bf16.mxu0 0
        %957 = vmatpush1.bf16.msra.mxu0 %v951
        %958 = vmatprep.subr.bf16.mxu0 0
        %959 = vmatpush1.bf16.msra.mxu0 0
        %960 = vmatprep.subr.bf16.mxu0 0
        %961 = vmatpush1.bf16.msra.mxu0 0
        %962 = vmatprep.subr.bf16.mxu0 0
        %963 = vmatpush1.bf16.msra.mxu0 0
        %964 = vmatprep.subr.bf16.mxu0 0
        %965 = vmatpush1.bf16.msra.mxu0 0
        %966 = vmatprep.subr.bf16.mxu0 0
        %967 = vmatpush1.bf16.msra.mxu0 0
        %968 = vmatprep.subr.bf16.mxu0 0
        %969 = vmatpush1.bf16.msra.mxu0 0
        %970 = vmatprep.subr.bf16.mxu0 0
        %971 = vmatpush1.bf16.msra.mxu0 0
        %972 = vmatprep.subr.bf16.mxu0 0
        %973 = vmatpush1.bf16.msra.mxu0 0
        %974 = vmatprep.subr.bf16.mxu0 0
        %975 = vmatpush1.bf16.msra.mxu0 0
        %976 = vmatprep.subr.bf16.mxu0 0
        %977 = vmatpush1.bf16.msra.mxu0 0
        %978 = vmatprep.subr.bf16.mxu0 0
        %979 = vmatpush1.bf16.msra.mxu0 0
        %980 = vmatprep.subr.bf16.mxu0 0
        %981 = vmatpush1.bf16.msra.mxu0 0
        %982 = vmatprep.subr.bf16.mxu0 0
        %983 = vmatpush1.bf16.msra.mxu0 0
        %984 = vmatprep.subr.bf16.mxu0 0
        %985 = vmatpush1.bf16.msra.mxu0 0
        %986 = vmatprep.mubr.bf16.mxu0 0
        %987 = vmatmul.mubr.bf16.gmra.mrb[0].mxu0 %v432
        %v988 = vpop.f32.mrb[0].mxu0
        %v989 = vadd.f32 %v401, %v988
        %v990 = vpop.f32.mrb[0].mxu0
        %v991 = vpop.f32.mrb[0].mxu0
        %v992 = vpop.f32.mrb[0].mxu0
        %993 = vdwg.mxu0
        %v998 = vunpack.c.l.b16 %v330
        %v999 = vunpack.c.l.b16 %v331
        %v1000 = vunpack.c.l.b16 %v332
        %v1001 = vunpack.c.l.b16 %v333
        %v1002 = vpack.c.b16 %v999, %v998
        %v1003 = vpack.c.b16 %v1001, %v1000
        %1006 = vmatprep.subr.bf16.mxu0 0
        %1007 = vmatpush1.bf16.msra.mxu0 %v1002
        %1008 = vmatprep.subr.bf16.mxu0 0
        %1009 = vmatpush1.bf16.msra.mxu0 %v1003
        %1010 = vmatprep.subr.bf16.mxu0 0
        %1011 = vmatpush1.bf16.msra.mxu0 0
        %1012 = vmatprep.subr.bf16.mxu0 0
        %1013 = vmatpush1.bf16.msra.mxu0 0
        %1014 = vmatprep.subr.bf16.mxu0 0
        %1015 = vmatpush1.bf16.msra.mxu0 0
        %1016 = vmatprep.subr.bf16.mxu0 0
        %1017 = vmatpush1.bf16.msra.mxu0 0
        %1018 = vmatprep.subr.bf16.mxu0 0
        %1019 = vmatpush1.bf16.msra.mxu0 0
        %1020 = vmatprep.subr.bf16.mxu0 0
        %1021 = vmatpush1.bf16.msra.mxu0 0
        %1022 = vmatprep.subr.bf16.mxu0 0
        %1023 = vmatpush1.bf16.msra.mxu0 0
        %1024 = vmatprep.subr.bf16.mxu0 0
        %1025 = vmatpush1.bf16.msra.mxu0 0
        %1026 = vmatprep.subr.bf16.mxu0 0
        %1027 = vmatpush1.bf16.msra.mxu0 0
        %1028 = vmatprep.subr.bf16.mxu0 0
        %1029 = vmatpush1.bf16.msra.mxu0 0
        %1030 = vmatprep.subr.bf16.mxu0 0
        %1031 = vmatpush1.bf16.msra.mxu0 0
        %1032 = vmatprep.subr.bf16.mxu0 0
        %1033 = vmatpush1.bf16.msra.mxu0 0
        %1034 = vmatprep.subr.bf16.mxu0 0
        %1035 = vmatpush1.bf16.msra.mxu0 0
        %1036 = vmatprep.subr.bf16.mxu0 0
        %1037 = vmatpush1.bf16.msra.mxu0 0
        %1038 = vmatprep.mubr.bf16.mxu0 0
        %1039 = vmatmul.mubr.bf16.gmra.mrb[0].mxu0 %v432
        %v1040 = vpop.f32.mrb[0].mxu0
        %v1041 = vadd.f32 %v405, %v1040
        %v1042 = vpop.f32.mrb[0].mxu0
        %v1043 = vpop.f32.mrb[0].mxu0
        %v1044 = vpop.f32.mrb[0].mxu0
        %1045 = vdwg.mxu0
        %v1046 = vpack.c.bf16 %v469, %v469
        %v1047 = vpack.c.bf16 %v521, %v521
        %v1048 = vpack.c.bf16 %v573, %v573
        %v1049 = vpack.c.bf16 %v625, %v625
        %v1050 = vpack.c.bf16 %v677, %v677
        %v1051 = vpack.c.bf16 %v729, %v729
        %v1052 = vpack.c.bf16 %v781, %v781
        %v1053 = vpack.c.bf16 %v833, %v833
        %v1054 = vpack.c.bf16 %v885, %v885
        %v1055 = vpack.c.bf16 %v937, %v937
        %v1056 = vpack.c.bf16 %v989, %v989
        %v1057 = vpack.c.bf16 %v1041, %v1041
        %v1058 = vlaneseq
        %v1059 = vshrl.u32 %v1058, 7
        %v1060 = vlaneseq
        %v1061 = vand.u32 %v1060, 127
        %vm1062 = vcmp.lt.s32.totalorder %v1059, 5
        %vm1063 = vcmp.lt.s32.totalorder %v1061, 5
        %vm1064 = vmxor %vm1062, %vm1063
        %vm1065 = vmxor %vm1064, 1
        %v1066 = vsel %vm1065, 0.0, -1e+30
        %v1068 = vsel %vm430, %v1046, 0
        %v1071 = vsel %vm430, %v1050, 0
        %1073 = vmatprep.subr.bf16.mxu0 0
        %1074 = vmatpush1.bf16.xpose.msra.mxu0 %v1071
        %1075 = vmatprep.subr.bf16.mxu0 0
        %1076 = vmatpush1.bf16.xpose.msra.mxu0 0
        %1077 = vmatprep.subr.bf16.mxu0 0
        %1078 = vmatpush1.bf16.xpose.msra.mxu0 0
        %1079 = vmatprep.subr.bf16.mxu0 0
        %1080 = vmatpush1.bf16.xpose.msra.mxu0 0
        %1081 = vmatprep.subr.bf16.mxu0 0
        %1082 = vmatpush1.bf16.xpose.msra.mxu0 0
        %1083 = vmatprep.subr.bf16.mxu0 0
        %1084 = vmatpush1.bf16.xpose.msra.mxu0 0
        %1085 = vmatprep.subr.bf16.mxu0 0
        %1086 = vmatpush1.bf16.xpose.msra.mxu0 0
        %1087 = vmatprep.subr.bf16.mxu0 0
        %1088 = vmatpush1.bf16.xpose.msra.mxu0 0
        %1089 = vmatprep.subr.bf16.mxu0 0
        %1090 = vmatpush1.bf16.xpose.msra.mxu0 0
        %1091 = vmatprep.subr.bf16.mxu0 0
        %1092 = vmatpush1.bf16.xpose.msra.mxu0 0
        %1093 = vmatprep.subr.bf16.mxu0 0
        %1094 = vmatpush1.bf16.xpose.msra.mxu0 0
        %1095 = vmatprep.subr.bf16.mxu0 0
        %1096 = vmatpush1.bf16.xpose.msra.mxu0 0
        %1097 = vmatprep.subr.bf16.mxu0 0
        %1098 = vmatpush1.bf16.xpose.msra.mxu0 0
        %1099 = vmatprep.subr.bf16.mxu0 0
        %1100 = vmatpush1.bf16.xpose.msra.mxu0 0
        %1101 = vmatprep.subr.bf16.mxu0 0
        %1102 = vmatpush1.bf16.xpose.msra.mxu0 0
        %1103 = vmatprep.subr.bf16.mxu0 0
        %1104 = vmatpush1.bf16.xpose.msra.mxu0 0
        %1105 = vmatprep.mubr.bf16.mxu0 0
        %1106 = vmatmul.mubr.bf16.gmra.mrb[0].mxu0 %v1068
        %v1107 = vpop.f32.mrb[0].mxu0
        %v1108 = vadd.f32 %v1066, %v1107
        %v1109 = vpop.f32.mrb[0].mxu0
        %v1110 = vpop.f32.mrb[0].mxu0
        %v1111 = vpop.f32.mrb[0].mxu0
        %1112 = vdwg.mxu0
        %v1114 = vsel %vm430, %v1047, 0
        %v1117 = vsel %vm430, %v1051, 0
        %1119 = vmatprep.subr.bf16.mxu0 0
        %1120 = vmatpush1.bf16.xpose.msra.mxu0 %v1117
        %1121 = vmatprep.subr.bf16.mxu0 0
        %1122 = vmatpush1.bf16.xpose.msra.mxu0 0
        %1123 = vmatprep.subr.bf16.mxu0 0
        %1124 = vmatpush1.bf16.xpose.msra.mxu0 0
        %1125 = vmatprep.subr.bf16.mxu0 0
        %1126 = vmatpush1.bf16.xpose.msra.mxu0 0
        %1127 = vmatprep.subr.bf16.mxu0 0
        %1128 = vmatpush1.bf16.xpose.msra.mxu0 0
        %1129 = vmatprep.subr.bf16.mxu0 0
        %1130 = vmatpush1.bf16.xpose.msra.mxu0 0
        %1131 = vmatprep.subr.bf16.mxu0 0
        %1132 = vmatpush1.bf16.xpose.msra.mxu0 0
        %1133 = vmatprep.subr.bf16.mxu0 0
        %1134 = vmatpush1.bf16.xpose.msra.mxu0 0
        %1135 = vmatprep.subr.bf16.mxu0 0
        %1136 = vmatpush1.bf16.xpose.msra.mxu0 0
        %1137 = vmatprep.subr.bf16.mxu0 0
        %1138 = vmatpush1.bf16.xpose.msra.mxu0 0
        %1139 = vmatprep.subr.bf16.mxu0 0
        %1140 = vmatpush1.bf16.xpose.msra.mxu0 0
        %1141 = vmatprep.subr.bf16.mxu0 0
        %1142 = vmatpush1.bf16.xpose.msra.mxu0 0
        %1143 = vmatprep.subr.bf16.mxu0 0
        %1144 = vmatpush1.bf16.xpose.msra.mxu0 0
        %1145 = vmatprep.subr.bf16.mxu0 0
        %1146 = vmatpush1.bf16.xpose.msra.mxu0 0
        %1147 = vmatprep.subr.bf16.mxu0 0
        %1148 = vmatpush1.bf16.xpose.msra.mxu0 0
        %1149 = vmatprep.subr.bf16.mxu0 0
        %1150 = vmatpush1.bf16.xpose.msra.mxu0 0
        %1151 = vmatprep.mubr.bf16.mxu0 0
        %1152 = vmatmul.mubr.bf16.gmra.mrb[0].mxu0 %v1114
        %v1153 = vpop.f32.mrb[0].mxu0
        %v1154 = vadd.f32 %v1066, %v1153
        %v1155 = vpop.f32.mrb[0].mxu0
        %v1156 = vpop.f32.mrb[0].mxu0
        %v1157 = vpop.f32.mrb[0].mxu0
        %1158 = vdwg.mxu0
        %v1160 = vsel %vm430, %v1048, 0
        %v1163 = vsel %vm430, %v1052, 0
        %1165 = vmatprep.subr.bf16.mxu0 0
        %1166 = vmatpush1.bf16.xpose.msra.mxu0 %v1163
        %1167 = vmatprep.subr.bf16.mxu0 0
        %1168 = vmatpush1.bf16.xpose.msra.mxu0 0
        %1169 = vmatprep.subr.bf16.mxu0 0
        %1170 = vmatpush1.bf16.xpose.msra.mxu0 0
        %1171 = vmatprep.subr.bf16.mxu0 0
        %1172 = vmatpush1.bf16.xpose.msra.mxu0 0
        %1173 = vmatprep.subr.bf16.mxu0 0
        %1174 = vmatpush1.bf16.xpose.msra.mxu0 0
        %1175 = vmatprep.subr.bf16.mxu0 0
        %1176 = vmatpush1.bf16.xpose.msra.mxu0 0
        %1177 = vmatprep.subr.bf16.mxu0 0
        %1178 = vmatpush1.bf16.xpose.msra.mxu0 0
        %1179 = vmatprep.subr.bf16.mxu0 0
        %1180 = vmatpush1.bf16.xpose.msra.mxu0 0
        %1181 = vmatprep.subr.bf16.mxu0 0
        %1182 = vmatpush1.bf16.xpose.msra.mxu0 0
        %1183 = vmatprep.subr.bf16.mxu0 0
        %1184 = vmatpush1.bf16.xpose.msra.mxu0 0
        %1185 = vmatprep.subr.bf16.mxu0 0
        %1186 = vmatpush1.bf16.xpose.msra.mxu0 0
        %1187 = vmatprep.subr.bf16.mxu0 0
        %1188 = vmatpush1.bf16.xpose.msra.mxu0 0
        %1189 = vmatprep.subr.bf16.mxu0 0
        %1190 = vmatpush1.bf16.xpose.msra.mxu0 0
        %1191 = vmatprep.subr.bf16.mxu0 0
        %1192 = vmatpush1.bf16.xpose.msra.mxu0 0
        %1193 = vmatprep.subr.bf16.mxu0 0
        %1194 = vmatpush1.bf16.xpose.msra.mxu0 0
        %1195 = vmatprep.subr.bf16.mxu0 0
        %1196 = vmatpush1.bf16.xpose.msra.mxu0 0
        %1197 = vmatprep.mubr.bf16.mxu0 0
        %1198 = vmatmul.mubr.bf16.gmra.mrb[0].mxu0 %v1160
        %v1199 = vpop.f32.mrb[0].mxu0
        %v1200 = vadd.f32 %v1066, %v1199
        %v1201 = vpop.f32.mrb[0].mxu0
        %v1202 = vpop.f32.mrb[0].mxu0
        %v1203 = vpop.f32.mrb[0].mxu0
        %1204 = vdwg.mxu0
        %v1206 = vsel %vm430, %v1049, 0
        %v1209 = vsel %vm430, %v1053, 0
        %1211 = vmatprep.subr.bf16.mxu0 0
        %1212 = vmatpush1.bf16.xpose.msra.mxu0 %v1209
        %1213 = vmatprep.subr.bf16.mxu0 0
        %1214 = vmatpush1.bf16.xpose.msra.mxu0 0
        %1215 = vmatprep.subr.bf16.mxu0 0
        %1216 = vmatpush1.bf16.xpose.msra.mxu0 0
        %1217 = vmatprep.subr.bf16.mxu0 0
        %1218 = vmatpush1.bf16.xpose.msra.mxu0 0
        %1219 = vmatprep.subr.bf16.mxu0 0
        %1220 = vmatpush1.bf16.xpose.msra.mxu0 0
        %1221 = vmatprep.subr.bf16.mxu0 0
        %1222 = vmatpush1.bf16.xpose.msra.mxu0 0
        %1223 = vmatprep.subr.bf16.mxu0 0
        %1224 = vmatpush1.bf16.xpose.msra.mxu0 0
        %1225 = vmatprep.subr.bf16.mxu0 0
        %1226 = vmatpush1.bf16.xpose.msra.mxu0 0
        %1227 = vmatprep.subr.bf16.mxu0 0
        %1228 = vmatpush1.bf16.xpose.msra.mxu0 0
        %1229 = vmatprep.subr.bf16.mxu0 0
        %1230 = vmatpush1.bf16.xpose.msra.mxu0 0
        %1231 = vmatprep.subr.bf16.mxu0 0
        %1232 = vmatpush1.bf16.xpose.msra.mxu0 0
        %1233 = vmatprep.subr.bf16.mxu0 0
        %1234 = vmatpush1.bf16.xpose.msra.mxu0 0
        %1235 = vmatprep.subr.bf16.mxu0 0
        %1236 = vmatpush1.bf16.xpose.msra.mxu0 0
        %1237 = vmatprep.subr.bf16.mxu0 0
        %1238 = vmatpush1.bf16.xpose.msra.mxu0 0
        %1239 = vmatprep.subr.bf16.mxu0 0
        %1240 = vmatpush1.bf16.xpose.msra.mxu0 0
        %1241 = vmatprep.subr.bf16.mxu0 0
        %1242 = vmatpush1.bf16.xpose.msra.mxu0 0
        %1243 = vmatprep.mubr.bf16.mxu0 0
        %1244 = vmatmul.mubr.bf16.gmra.mrb[0].mxu0 %v1206
        %v1245 = vpop.f32.mrb[0].mxu0
        %v1246 = vadd.f32 %v1066, %v1245
        %v1247 = vpop.f32.mrb[0].mxu0
        %v1248 = vpop.f32.mrb[0].mxu0
        %v1249 = vpop.f32.mrb[0].mxu0
        %1250 = vdwg.mxu0
        %vm1251 = vcmask 64512
        %v1252 = vsel %vm1251, %v1108, -inf
        %1253 = vmax.xlane.f32.xlu0 %v1252
        %v1254 = vpop.xlane.xlu0 %1253
        %v1255 = vsel %vm1251, %v1154, -inf
        %1256 = vmax.xlane.f32.xlu0 %v1255
        %v1257 = vpop.xlane.xlu0 %1256
        %v1258 = vsel %vm1251, %v1200, -inf
        %1259 = vmax.xlane.f32.xlu0 %v1258
        %v1260 = vpop.xlane.xlu0 %1259
        %v1261 = vsel %vm1251, %v1246, -inf
        %1262 = vmax.xlane.f32.xlu0 %v1261
        %v1263 = vpop.xlane.xlu0 %1262
        %v1264 = vsub.f32 %v1108, %v1254
        %v1265 = vsub.f32 %v1154, %v1257
        %v1266 = vsub.f32 %v1200, %v1260
        %v1267 = vsub.f32 %v1246, %v1263
        %v1268 = vmul.f32 %v1264, 1.442695
        %v1269 = vpow.pop %v1268
        %v1270 = vmul.f32 %v1265, 1.442695
        %v1271 = vpow.pop %v1270
        %v1272 = vmul.f32 %v1266, 1.442695
        %v1273 = vpow.pop %v1272
        %v1274 = vmul.f32 %v1267, 1.442695
        %v1275 = vpow.pop %v1274
        %v1276 = vsel %vm1251, %v1269, 0.0
        %1277 = vadd.xlane.f32.xlu0 %v1276
        %v1278 = vpop.xlane.xlu0 %1277
        %v1279 = vsel %vm1251, %v1271, 0.0
        %1280 = vadd.xlane.f32.xlu0 %v1279
        %v1281 = vpop.xlane.xlu0 %1280
        %v1282 = vsel %vm1251, %v1273, 0.0
        %1283 = vadd.xlane.f32.xlu0 %v1282
        %v1284 = vpop.xlane.xlu0 %1283
        %v1285 = vsel %vm1251, %v1275, 0.0
        %1286 = vadd.xlane.f32.xlu0 %v1285
        %v1287 = vpop.xlane.xlu0 %1286
        %v1288 = vrcp.pop %v1278
        %v1289 = vrcp.pop %v1281
        %v1290 = vrcp.pop %v1284
        %v1291 = vrcp.pop %v1287
        %v1292 = vmul.f32 %v1269, %v1288
        %v1293 = vmul.f32 %v1271, %v1289
        %v1294 = vmul.f32 %v1273, %v1290
        %v1295 = vmul.f32 %v1275, %v1291
        %v1296 = vpack.c.bf16 %v1292, %v1292
        %v1297 = vpack.c.bf16 %v1293, %v1293
        %v1298 = vpack.c.bf16 %v1294, %v1294
        %v1299 = vpack.c.bf16 %v1295, %v1295
        %v1301 = vsel %vm1251, %v1296, 0
        %vm1303 = vcmask 1043456
        %v1305 = vsel %vm1303, %v1054, 0
        %1307 = vmatprep.subr.bf16.mxu0 0
        %1308 = vmatpush1.bf16.msra.mxu0 %v1305
        %1309 = vmatprep.subr.bf16.mxu0 0
        %1310 = vmatpush1.bf16.msra.mxu0 0
        %1311 = vmatprep.subr.bf16.mxu0 0
        %1312 = vmatpush1.bf16.msra.mxu0 0
        %1313 = vmatprep.subr.bf16.mxu0 0
        %1314 = vmatpush1.bf16.msra.mxu0 0
        %1315 = vmatprep.subr.bf16.mxu0 0
        %1316 = vmatpush1.bf16.msra.mxu0 0
        %1317 = vmatprep.subr.bf16.mxu0 0
        %1318 = vmatpush1.bf16.msra.mxu0 0
        %1319 = vmatprep.subr.bf16.mxu0 0
        %1320 = vmatpush1.bf16.msra.mxu0 0
        %1321 = vmatprep.subr.bf16.mxu0 0
        %1322 = vmatpush1.bf16.msra.mxu0 0
        %1323 = vmatprep.subr.bf16.mxu0 0
        %1324 = vmatpush1.bf16.msra.mxu0 0
        %1325 = vmatprep.subr.bf16.mxu0 0
        %1326 = vmatpush1.bf16.msra.mxu0 0
        %1327 = vmatprep.subr.bf16.mxu0 0
        %1328 = vmatpush1.bf16.msra.mxu0 0
        %1329 = vmatprep.subr.bf16.mxu0 0
        %1330 = vmatpush1.bf16.msra.mxu0 0
        %1331 = vmatprep.subr.bf16.mxu0 0
        %1332 = vmatpush1.bf16.msra.mxu0 0
        %1333 = vmatprep.subr.bf16.mxu0 0
        %1334 = vmatpush1.bf16.msra.mxu0 0
        %1335 = vmatprep.subr.bf16.mxu0 0
        %1336 = vmatpush1.bf16.msra.mxu0 0
        %1337 = vmatprep.subr.bf16.mxu0 0
        %1338 = vmatpush1.bf16.msra.mxu0 0
        %1339 = vmatprep.mubr.bf16.mxu0 0
        %1340 = vmatmul.mubr.bf16.gmra.mrb[0].mxu0 %v1301
        %v1341 = vpop.f32.mrb[0].mxu0
        %v1342 = vadd.f32 0.0, %v1341
        %v1343 = vpop.f32.mrb[0].mxu0
        %v1344 = vpop.f32.mrb[0].mxu0
        %v1345 = vpop.f32.mrb[0].mxu0
        %1346 = vdwg.mxu0
        %v1348 = vsel %vm1251, %v1297, 0
        %v1351 = vsel %vm1303, %v1055, 0
        %1353 = vmatprep.subr.bf16.mxu0 0
        %1354 = vmatpush1.bf16.msra.mxu0 %v1351
        %1355 = vmatprep.subr.bf16.mxu0 0
        %1356 = vmatpush1.bf16.msra.mxu0 0
        %1357 = vmatprep.subr.bf16.mxu0 0
        %1358 = vmatpush1.bf16.msra.mxu0 0
        %1359 = vmatprep.subr.bf16.mxu0 0
        %1360 = vmatpush1.bf16.msra.mxu0 0
        %1361 = vmatprep.subr.bf16.mxu0 0
        %1362 = vmatpush1.bf16.msra.mxu0 0
        %1363 = vmatprep.subr.bf16.mxu0 0
        %1364 = vmatpush1.bf16.msra.mxu0 0
        %1365 = vmatprep.subr.bf16.mxu0 0
        %1366 = vmatpush1.bf16.msra.mxu0 0
        %1367 = vmatprep.subr.bf16.mxu0 0
        %1368 = vmatpush1.bf16.msra.mxu0 0
        %1369 = vmatprep.subr.bf16.mxu0 0
        %1370 = vmatpush1.bf16.msra.mxu0 0
        %1371 = vmatprep.subr.bf16.mxu0 0
        %1372 = vmatpush1.bf16.msra.mxu0 0
        %1373 = vmatprep.subr.bf16.mxu0 0
        %1374 = vmatpush1.bf16.msra.mxu0 0
        %1375 = vmatprep.subr.bf16.mxu0 0
        %1376 = vmatpush1.bf16.msra.mxu0 0
        %1377 = vmatprep.subr.bf16.mxu0 0
        %1378 = vmatpush1.bf16.msra.mxu0 0
        %1379 = vmatprep.subr.bf16.mxu0 0
        %1380 = vmatpush1.bf16.msra.mxu0 0
        %1381 = vmatprep.subr.bf16.mxu0 0
        %1382 = vmatpush1.bf16.msra.mxu0 0
        %1383 = vmatprep.subr.bf16.mxu0 0
        %1384 = vmatpush1.bf16.msra.mxu0 0
        %1385 = vmatprep.mubr.bf16.mxu0 0
        %1386 = vmatmul.mubr.bf16.gmra.mrb[0].mxu0 %v1348
        %v1387 = vpop.f32.mrb[0].mxu0
        %v1388 = vadd.f32 0.0, %v1387
        %v1389 = vpop.f32.mrb[0].mxu0
        %v1390 = vpop.f32.mrb[0].mxu0
        %v1391 = vpop.f32.mrb[0].mxu0
        %1392 = vdwg.mxu0
        %v1394 = vsel %vm1251, %v1298, 0
        %v1397 = vsel %vm1303, %v1056, 0
        %1399 = vmatprep.subr.bf16.mxu0 0
        %1400 = vmatpush1.bf16.msra.mxu0 %v1397
        %1401 = vmatprep.subr.bf16.mxu0 0
        %1402 = vmatpush1.bf16.msra.mxu0 0
        %1403 = vmatprep.subr.bf16.mxu0 0
        %1404 = vmatpush1.bf16.msra.mxu0 0
        %1405 = vmatprep.subr.bf16.mxu0 0
        %1406 = vmatpush1.bf16.msra.mxu0 0
        %1407 = vmatprep.subr.bf16.mxu0 0
        %1408 = vmatpush1.bf16.msra.mxu0 0
        %1409 = vmatprep.subr.bf16.mxu0 0
        %1410 = vmatpush1.bf16.msra.mxu0 0
        %1411 = vmatprep.subr.bf16.mxu0 0
        %1412 = vmatpush1.bf16.msra.mxu0 0
        %1413 = vmatprep.subr.bf16.mxu0 0
        %1414 = vmatpush1.bf16.msra.mxu0 0
        %1415 = vmatprep.subr.bf16.mxu0 0
        %1416 = vmatpush1.bf16.msra.mxu0 0
        %1417 = vmatprep.subr.bf16.mxu0 0
        %1418 = vmatpush1.bf16.msra.mxu0 0
        %1419 = vmatprep.subr.bf16.mxu0 0
        %1420 = vmatpush1.bf16.msra.mxu0 0
        %1421 = vmatprep.subr.bf16.mxu0 0
        %1422 = vmatpush1.bf16.msra.mxu0 0
        %1423 = vmatprep.subr.bf16.mxu0 0
        %1424 = vmatpush1.bf16.msra.mxu0 0
        %1425 = vmatprep.subr.bf16.mxu0 0
        %1426 = vmatpush1.bf16.msra.mxu0 0
        %1427 = vmatprep.subr.bf16.mxu0 0
        %1428 = vmatpush1.bf16.msra.mxu0 0
        %1429 = vmatprep.subr.bf16.mxu0 0
        %1430 = vmatpush1.bf16.msra.mxu0 0
        %1431 = vmatprep.mubr.bf16.mxu0 0
        %1432 = vmatmul.mubr.bf16.gmra.mrb[0].mxu0 %v1394
        %v1433 = vpop.f32.mrb[0].mxu0
        %v1434 = vadd.f32 0.0, %v1433
        %v1435 = vpop.f32.mrb[0].mxu0
        %v1436 = vpop.f32.mrb[0].mxu0
        %v1437 = vpop.f32.mrb[0].mxu0
        %1438 = vdwg.mxu0
        %v1440 = vsel %vm1251, %v1299, 0
        %v1443 = vsel %vm1303, %v1057, 0
        %1445 = vmatprep.subr.bf16.mxu0 0
        %1446 = vmatpush1.bf16.msra.mxu0 %v1443
        %1447 = vmatprep.subr.bf16.mxu0 0
        %1448 = vmatpush1.bf16.msra.mxu0 0
        %1449 = vmatprep.subr.bf16.mxu0 0
        %1450 = vmatpush1.bf16.msra.mxu0 0
        %1451 = vmatprep.subr.bf16.mxu0 0
        %1452 = vmatpush1.bf16.msra.mxu0 0
        %1453 = vmatprep.subr.bf16.mxu0 0
        %1454 = vmatpush1.bf16.msra.mxu0 0
        %1455 = vmatprep.subr.bf16.mxu0 0
        %1456 = vmatpush1.bf16.msra.mxu0 0
        %1457 = vmatprep.subr.bf16.mxu0 0
        %1458 = vmatpush1.bf16.msra.mxu0 0
        %1459 = vmatprep.subr.bf16.mxu0 0
        %1460 = vmatpush1.bf16.msra.mxu0 0
        %1461 = vmatprep.subr.bf16.mxu0 0
        %1462 = vmatpush1.bf16.msra.mxu0 0
        %1463 = vmatprep.subr.bf16.mxu0 0
        %1464 = vmatpush1.bf16.msra.mxu0 0
        %1465 = vmatprep.subr.bf16.mxu0 0
        %1466 = vmatpush1.bf16.msra.mxu0 0
        %1467 = vmatprep.subr.bf16.mxu0 0
        %1468 = vmatpush1.bf16.msra.mxu0 0
        %1469 = vmatprep.subr.bf16.mxu0 0
        %1470 = vmatpush1.bf16.msra.mxu0 0
        %1471 = vmatprep.subr.bf16.mxu0 0
        %1472 = vmatpush1.bf16.msra.mxu0 0
        %1473 = vmatprep.subr.bf16.mxu0 0
        %1474 = vmatpush1.bf16.msra.mxu0 0
        %1475 = vmatprep.subr.bf16.mxu0 0
        %1476 = vmatpush1.bf16.msra.mxu0 0
        %1477 = vmatprep.mubr.bf16.mxu0 0
        %1478 = vmatmul.mubr.bf16.gmra.mrb[0].mxu0 %v1440
        %v1479 = vpop.f32.mrb[0].mxu0
        %v1480 = vadd.f32 0.0, %v1479
        %v1481 = vpop.f32.mrb[0].mxu0
        %v1482 = vpop.f32.mrb[0].mxu0
        %v1483 = vpop.f32.mrb[0].mxu0
        %1484 = vdwg.mxu0
        %v1485 = vpack.c.bf16 %v1342, %v1342
        %v1486 = vpack.c.bf16 %v1388, %v1388
        %v1487 = vpack.c.bf16 %v1434, %v1434
        %v1488 = vpack.c.bf16 %v1480, %v1480
        %v1489 = vld [vmem:[#allocation8] sm:$0xf]
        %v1490 = vld [vmem:[#allocation8 + $0x4] sm:$0xf]
        %v1491 = vld [vmem:[#allocation8 + $0x8] sm:$0xf]
        %v1492 = vld [vmem:[#allocation8 + $0xc] sm:$0xf]
        %v1493 = vld [vmem:[#allocation8 + $0x10] sm:$0xf]
        %v1494 = vld [vmem:[#allocation8 + $0x14] sm:$0xf]
        %v1495 = vld [vmem:[#allocation8 + $0x18] sm:$0xf]
        %v1496 = vld [vmem:[#allocation8 + $0x1c] sm:$0xf]
        %v1497 = vld [vmem:[#allocation8 + $0x20] sm:$0xf]
        %v1498 = vld [vmem:[#allocation8 + $0x24] sm:$0xf]
        %v1499 = vld [vmem:[#allocation8 + $0x28] sm:$0xf]
        %v1500 = vld [vmem:[#allocation8 + $0x2c] sm:$0xf]
        %v1501 = vld [vmem:[#allocation8 + $0x30] sm:$0xf]
        %v1502 = vld [vmem:[#allocation8 + $0x34] sm:$0xf]
        %v1503 = vld [vmem:[#allocation8 + $0x38] sm:$0xf]
        %v1504 = vld [vmem:[#allocation8 + $0x3c] sm:$0xf]
        %v1509 = vunpack.c.l.b16 %v1489
        %v1510 = vunpack.c.l.b16 %v1490
        %v1511 = vunpack.c.l.b16 %v1491
        %v1512 = vunpack.c.l.b16 %v1492
        %v1513 = vpack.c.b16 %v1510, %v1509
        %v1514 = vpack.c.b16 %v1512, %v1511
        %v1518 = vsel %vm430, %v1485, 0
        %1520 = vmatprep.subr.bf16.mxu0 0
        %1521 = vmatpush1.bf16.msra.mxu0 %v1513
        %1522 = vmatprep.subr.bf16.mxu0 0
        %1523 = vmatpush1.bf16.msra.mxu0 %v1514
        %1524 = vmatprep.subr.bf16.mxu0 0
        %1525 = vmatpush1.bf16.msra.mxu0 0
        %1526 = vmatprep.subr.bf16.mxu0 0
        %1527 = vmatpush1.bf16.msra.mxu0 0
        %1528 = vmatprep.subr.bf16.mxu0 0
        %1529 = vmatpush1.bf16.msra.mxu0 0
        %1530 = vmatprep.subr.bf16.mxu0 0
        %1531 = vmatpush1.bf16.msra.mxu0 0
        %1532 = vmatprep.subr.bf16.mxu0 0
        %1533 = vmatpush1.bf16.msra.mxu0 0
        %1534 = vmatprep.subr.bf16.mxu0 0
        %1535 = vmatpush1.bf16.msra.mxu0 0
        %1536 = vmatprep.subr.bf16.mxu0 0
        %1537 = vmatpush1.bf16.msra.mxu0 0
        %1538 = vmatprep.subr.bf16.mxu0 0
        %1539 = vmatpush1.bf16.msra.mxu0 0
        %1540 = vmatprep.subr.bf16.mxu0 0
        %1541 = vmatpush1.bf16.msra.mxu0 0
        %1542 = vmatprep.subr.bf16.mxu0 0
        %1543 = vmatpush1.bf16.msra.mxu0 0
        %1544 = vmatprep.subr.bf16.mxu0 0
        %1545 = vmatpush1.bf16.msra.mxu0 0
        %1546 = vmatprep.subr.bf16.mxu0 0
        %1547 = vmatpush1.bf16.msra.mxu0 0
        %1548 = vmatprep.subr.bf16.mxu0 0
        %1549 = vmatpush1.bf16.msra.mxu0 0
        %1550 = vmatprep.subr.bf16.mxu0 0
        %1551 = vmatpush1.bf16.msra.mxu0 0
        %1552 = vmatprep.mubr.bf16.mxu0 0
        %1553 = vmatmul.mubr.bf16.gmra.mrb[0].mxu0 %v1518
        %v1554 = vpop.f32.mrb[0].mxu0
        %v1555 = vadd.f32 0.0, %v1554
        %v1556 = vpop.f32.mrb[0].mxu0
        %v1557 = vpop.f32.mrb[0].mxu0
        %v1558 = vpop.f32.mrb[0].mxu0
        %1559 = vdwg.mxu0
        %v1564 = vunpack.c.l.b16 %v1493
        %v1565 = vunpack.c.l.b16 %v1494
        %v1566 = vunpack.c.l.b16 %v1495
        %v1567 = vunpack.c.l.b16 %v1496
        %v1568 = vpack.c.b16 %v1565, %v1564
        %v1569 = vpack.c.b16 %v1567, %v1566
        %v1573 = vsel %vm430, %v1486, 0
        %1575 = vmatprep.subr.bf16.mxu0 0
        %1576 = vmatpush1.bf16.msra.mxu0 %v1568
        %1577 = vmatprep.subr.bf16.mxu0 0
        %1578 = vmatpush1.bf16.msra.mxu0 %v1569
        %1579 = vmatprep.subr.bf16.mxu0 0
        %1580 = vmatpush1.bf16.msra.mxu0 0
        %1581 = vmatprep.subr.bf16.mxu0 0
        %1582 = vmatpush1.bf16.msra.mxu0 0
        %1583 = vmatprep.subr.bf16.mxu0 0
        %1584 = vmatpush1.bf16.msra.mxu0 0
        %1585 = vmatprep.subr.bf16.mxu0 0
        %1586 = vmatpush1.bf16.msra.mxu0 0
        %1587 = vmatprep.subr.bf16.mxu0 0
        %1588 = vmatpush1.bf16.msra.mxu0 0
        %1589 = vmatprep.subr.bf16.mxu0 0
        %1590 = vmatpush1.bf16.msra.mxu0 0
        %1591 = vmatprep.subr.bf16.mxu0 0
        %1592 = vmatpush1.bf16.msra.mxu0 0
        %1593 = vmatprep.subr.bf16.mxu0 0
        %1594 = vmatpush1.bf16.msra.mxu0 0
        %1595 = vmatprep.subr.bf16.mxu0 0
        %1596 = vmatpush1.bf16.msra.mxu0 0
        %1597 = vmatprep.subr.bf16.mxu0 0
        %1598 = vmatpush1.bf16.msra.mxu0 0
        %1599 = vmatprep.subr.bf16.mxu0 0
        %1600 = vmatpush1.bf16.msra.mxu0 0
        %1601 = vmatprep.subr.bf16.mxu0 0
        %1602 = vmatpush1.bf16.msra.mxu0 0
        %1603 = vmatprep.subr.bf16.mxu0 0
        %1604 = vmatpush1.bf16.msra.mxu0 0
        %1605 = vmatprep.subr.bf16.mxu0 0
        %1606 = vmatpush1.bf16.msra.mxu0 0
        %1607 = vmatprep.mubr.bf16.mxu0 0
        %1608 = vmatmul.mubr.bf16.gmra.mrb[0].mxu0 %v1573
        %v1609 = vpop.f32.mrb[0].mxu0
        %v1610 = vadd.f32 0.0, %v1609
        %v1611 = vpop.f32.mrb[0].mxu0
        %v1612 = vpop.f32.mrb[0].mxu0
        %v1613 = vpop.f32.mrb[0].mxu0
        %1614 = vdwg.mxu0
        %v1619 = vunpack.c.l.b16 %v1497
        %v1620 = vunpack.c.l.b16 %v1498
        %v1621 = vunpack.c.l.b16 %v1499
        %v1622 = vunpack.c.l.b16 %v1500
        %v1623 = vpack.c.b16 %v1620, %v1619
        %v1624 = vpack.c.b16 %v1622, %v1621
        %v1628 = vsel %vm430, %v1487, 0
        %1630 = vmatprep.subr.bf16.mxu0 0
        %1631 = vmatpush1.bf16.msra.mxu0 %v1623
        %1632 = vmatprep.subr.bf16.mxu0 0
        %1633 = vmatpush1.bf16.msra.mxu0 %v1624
        %1634 = vmatprep.subr.bf16.mxu0 0
        %1635 = vmatpush1.bf16.msra.mxu0 0
        %1636 = vmatprep.subr.bf16.mxu0 0
        %1637 = vmatpush1.bf16.msra.mxu0 0
        %1638 = vmatprep.subr.bf16.mxu0 0
        %1639 = vmatpush1.bf16.msra.mxu0 0
        %1640 = vmatprep.subr.bf16.mxu0 0
        %1641 = vmatpush1.bf16.msra.mxu0 0
        %1642 = vmatprep.subr.bf16.mxu0 0
        %1643 = vmatpush1.bf16.msra.mxu0 0
        %1644 = vmatprep.subr.bf16.mxu0 0
        %1645 = vmatpush1.bf16.msra.mxu0 0
        %1646 = vmatprep.subr.bf16.mxu0 0
        %1647 = vmatpush1.bf16.msra.mxu0 0
        %1648 = vmatprep.subr.bf16.mxu0 0
        %1649 = vmatpush1.bf16.msra.mxu0 0
        %1650 = vmatprep.subr.bf16.mxu0 0
        %1651 = vmatpush1.bf16.msra.mxu0 0
        %1652 = vmatprep.subr.bf16.mxu0 0
        %1653 = vmatpush1.bf16.msra.mxu0 0
        %1654 = vmatprep.subr.bf16.mxu0 0
        %1655 = vmatpush1.bf16.msra.mxu0 0
        %1656 = vmatprep.subr.bf16.mxu0 0
        %1657 = vmatpush1.bf16.msra.mxu0 0
        %1658 = vmatprep.subr.bf16.mxu0 0
        %1659 = vmatpush1.bf16.msra.mxu0 0
        %1660 = vmatprep.subr.bf16.mxu0 0
        %1661 = vmatpush1.bf16.msra.mxu0 0
        %1662 = vmatprep.mubr.bf16.mxu0 0
        %1663 = vmatmul.mubr.bf16.gmra.mrb[0].mxu0 %v1628
        %v1664 = vpop.f32.mrb[0].mxu0
        %v1665 = vadd.f32 0.0, %v1664
        %v1666 = vpop.f32.mrb[0].mxu0
        %v1667 = vpop.f32.mrb[0].mxu0
        %v1668 = vpop.f32.mrb[0].mxu0
        %1669 = vdwg.mxu0
        %v1674 = vunpack.c.l.b16 %v1501
        %v1675 = vunpack.c.l.b16 %v1502
        %v1676 = vunpack.c.l.b16 %v1503
        %v1677 = vunpack.c.l.b16 %v1504
        %v1678 = vpack.c.b16 %v1675, %v1674
        %v1679 = vpack.c.b16 %v1677, %v1676
        %v1683 = vsel %vm430, %v1488, 0
        %1685 = vmatprep.subr.bf16.mxu0 0
        %1686 = vmatpush1.bf16.msra.mxu0 %v1678
        %1687 = vmatprep.subr.bf16.mxu0 0
        %1688 = vmatpush1.bf16.msra.mxu0 %v1679
        %1689 = vmatprep.subr.bf16.mxu0 0
        %1690 = vmatpush1.bf16.msra.mxu0 0
        %1691 = vmatprep.subr.bf16.mxu0 0
        %1692 = vmatpush1.bf16.msra.mxu0 0
        %1693 = vmatprep.subr.bf16.mxu0 0
        %1694 = vmatpush1.bf16.msra.mxu0 0
        %1695 = vmatprep.subr.bf16.mxu0 0
        %1696 = vmatpush1.bf16.msra.mxu0 0
        %1697 = vmatprep.subr.bf16.mxu0 0
        %1698 = vmatpush1.bf16.msra.mxu0 0
        %1699 = vmatprep.subr.bf16.mxu0 0
        %1700 = vmatpush1.bf16.msra.mxu0 0
        %1701 = vmatprep.subr.bf16.mxu0 0
        %1702 = vmatpush1.bf16.msra.mxu0 0
        %1703 = vmatprep.subr.bf16.mxu0 0
        %1704 = vmatpush1.bf16.msra.mxu0 0
        %1705 = vmatprep.subr.bf16.mxu0 0
        %1706 = vmatpush1.bf16.msra.mxu0 0
        %1707 = vmatprep.subr.bf16.mxu0 0
        %1708 = vmatpush1.bf16.msra.mxu0 0
        %1709 = vmatprep.subr.bf16.mxu0 0
        %1710 = vmatpush1.bf16.msra.mxu0 0
        %1711 = vmatprep.subr.bf16.mxu0 0
        %1712 = vmatpush1.bf16.msra.mxu0 0
        %1713 = vmatprep.subr.bf16.mxu0 0
        %1714 = vmatpush1.bf16.msra.mxu0 0
        %1715 = vmatprep.subr.bf16.mxu0 0
        %1716 = vmatpush1.bf16.msra.mxu0 0
        %1717 = vmatprep.mubr.bf16.mxu0 0
        %1718 = vmatmul.mubr.bf16.gmra.mrb[0].mxu0 %v1683
        %v1719 = vpop.f32.mrb[0].mxu0
        %v1720 = vadd.f32 0.0, %v1719
        %v1721 = vpop.f32.mrb[0].mxu0
        %v1722 = vpop.f32.mrb[0].mxu0
        %v1723 = vpop.f32.mrb[0].mxu0
        %1724 = vdwg.mxu0
        %v1725 = vsel %vm430, %v1555, 0.0
        %v1726 = vsel %vm430, %v1610, 0.0
        %v1727 = vadd.f32 %v1725, %v1726
        %v1728 = vsel %vm430, %v1665, 0.0
        %v1729 = vsel %vm430, %v1720, 0.0
        %v1730 = vadd.f32 %v1728, %v1729
        %v1731 = vsel %vm1062, 1, 0
        %vm1732 = vcmp.eq.s32.totalorder %v1731, 1
        %v1733 = vsel %vm1732, %v1727, %v1730
        %v1734 = vld [vmem:[%s4] sm:$0x1]
        %v1736 = vlaneseq
        %v1737 = vshrl.u32 %v1736, 7
        %v1738 = vsub.s32 0, %v1737
        %v1739 = vrot.slane %v1734, %v1738
        %v1741 = vadd.f32 %v1733, %v1739
        %1742 = vst.msk [vmem:[%s283] sm:$0xff] %vm430, %v1741
        %s1743 = sand.u32 %s142, 1
        %s1744 = scalar_lea.sflag [#allocation4], %s1743
        %s1745 = sand.u32 %s142, 1
        %s1746 = smul.addr %s1745, 8
        %s1747 = scalar_lea.vmem [#allocation10], %s1746
        // Predicated region
        $region57: #{tpu_custom_call.1} parent=39 // pred_check
          %p1748 = pneg %p152
        $region58: #{tpu_custom_call.1} parent=39 // pred_check_branch
          %1750 = sbr.rel (%p1748) target = $region60
        $region59: #{tpu_custom_call.1} parent=39 // pred_region
          %s1752 = ssub.s32 128, 128
          %1753 = vsyncadd %s1744, %s1752
          %s1754 = smul.addr %s24, 128
          %s1755 = scalar_lea.hbm %s5, %s1754
          %s1757 = sshll.u32 %s1747, 4
          %s1758 = int_to_ptr.vmem [resolvable:$true] %s1757
          %1760 = dma.vmem_to_hbm [thread:$0]  %s1758, 128, %s1755, %s1744
        $region60: #{tpu_custom_call.1} parent=39 // pred_fallthru
          _
      $region40: #{tpu_custom_call.1} parent=5 // pred_fallthru
        _
      %p1761 = scmp.le.s32.totalorder 2, %s19
      // Predicated region
      $region61: #{tpu_custom_call.1} parent=5 // pred_check
        %p1762 = pneg %p1761
      $region62: #{tpu_custom_call.1} parent=5 // pred_check_branch
        %1764 = sbr.rel (%p1762) target = $region64
      $region63: #{tpu_custom_call.1} parent=5 // pred_region
        %s1765 = ssub.s32 %s19, 2
        // Predicated region
        $region65: #{tpu_custom_call.1} parent=63 // pred_check
          %p1766 = pneg %p158
        $region66: #{tpu_custom_call.1} parent=63 // pred_check_branch
          %1768 = sbr.rel (%p1766) target = $region68
        $region67: #{tpu_custom_call.1} parent=63 // pred_region
          %s1769 = sand.u32 %s143, 1
          %s1770 = scalar_lea.sflag [#allocation4], %s1769
          %s1771 = sand.u32 %s143, 1
          %s1772 = smul.addr %s1771, 8
          %s1773 = scalar_lea.vmem [#allocation10], %s1772
          %1774 = dma.done %s1770, 128
        $region68: #{tpu_custom_call.1} parent=63 // pred_fallthru
          _
      $region64: #{tpu_custom_call.1} parent=5 // pred_fallthru
        _
    $region6: #{tpu_custom_call.1} parent=1 // loop_footer
      %s23 = sadd.s32 1, %s19
    $region7: #{tpu_custom_call.1} parent=1 // loop_footer_branch
      %18 = sbr.rel target = $region3
    $region8: #{tpu_custom_call.1} parent=1 // loop_exit
      _
    %1775 = vsyncpa [#allocation3], 1
    %s1776 = scalar_lea.sflag [#allocation3], 1
    %1777 = vsyncpa %s1776, 1
    %1778 = vsyncpa [#allocation6], 1
    %1779 = vsyncpa [#allocation9], 1
    %1780 = vsyncpa [#allocation4], 1
    %s1781 = scalar_lea.sflag [#allocation4], 1
    %1782 = vsyncpa %s1781, 1

</llo_original>
